<compile_context>
chip_gen: v7x
topology: tpu7x:2x2x1
jax: 0.10.0
libtpu: 0.0.40
codegen_flags: <defaults>
</compile_context>

<pallas_src>
import numpy as np
import jax
import jax.numpy as jnp
from jax import lax
from jax.experimental import pallas as pl
from jax.experimental.pallas import tpu as pltpu


def _round_up(x, m):
    return (x + m - 1) // m * m


def gru_recurrence_kernel(gi_ref, whh_ref, bhhn_ref, ann_ref, h_scr):
    """Sequential GRU recurrence over one time-major (T_CHUNK, B_TILE) block.

    gi_ref  : (T_CHUNK, B_TILE, 3*Hp) bf16  precomputed x@W_ih^T + folded biases.
    whh_ref : (Hp, 3*Hp) bf16               hidden->gate weights (transposed).
    bhhn_ref: (1, Hp) f32                   n-gate part of b_hh (not foldable).
    ann_ref : (T_CHUNK, B_TILE, Hp) f32     hidden states (annotations), time-major.
    h_scr   : (B_TILE, Hp) f32              hidden state carried across time chunks.
    """
    t_chunk_idx = pl.program_id(1)
    b_tile, Hp = h_scr.shape
    t_chunk = ann_ref.shape[0]

    # init_hidden: zeros at the first time chunk of every batch tile.
    @pl.when(t_chunk_idx == 0)
    def _():
        h_scr[...] = jnp.zeros_like(h_scr)

    whh = whh_ref[...]                                      # resident weight
    bhh_n = jnp.broadcast_to(bhhn_ref[...], (b_tile, Hp))   # hoisted out of loop
    h = h_scr[...]                                          # (B_TILE, Hp) f32

    # TODO(synk): for the small-batch latency-bound regime, drive the MXU
    # explicitly (matmul_push_rhs once per chunk, matmul_acc_lhs/pop per step)
    # instead of re-streaming W_hh through jnp.dot every timestep.
    for tc in range(t_chunk):  # small static chunk -> unrolled, LLO-visible
        gi = gi_ref[tc].astype(jnp.float32)   # contiguous leading-axis view
        gh = jnp.dot(h.astype(jnp.bfloat16), whh,
                     preferred_element_type=jnp.float32)
        r = jax.nn.sigmoid(gi[:, 0:Hp] + gh[:, 0:Hp])
        z = jax.nn.sigmoid(gi[:, Hp:2 * Hp] + gh[:, Hp:2 * Hp])
        n = jnp.tanh(gi[:, 2 * Hp:3 * Hp] + r * (gh[:, 2 * Hp:3 * Hp] + bhh_n))
        h = (1.0 - z) * n + z * h             # torch.nn.GRUCell update rule
        ann_ref[tc] = h.astype(ann_ref.dtype)  # per-step lane-dense full-tile store

    h_scr[...] = h


def gru_encoder_forward(inputs, emb, w_ih, w_hh, b_ih, b_hh, *, t_chunk=16):
    """Pallas implementation of GRUEncoder.forward.

    Args:
      inputs: int32 (B, T) token indices.
      emb:    (vocab, H) embedding table.
      w_ih:   (3H, H) GRUCell input weights  (torch layout, gate order r,z,n).
      w_hh:   (3H, H) GRUCell hidden weights (torch layout).
      b_ih:   (3H,)   input bias.
      b_hh:   (3H,)   hidden bias.
    Returns:
      annotations (B, T, H), hidden (B, H)
    """
    B, T = inputs.shape
    H = emb.shape[1]
    f32 = jnp.float32
    bf16 = jnp.bfloat16

    Hp = _round_up(H, 128)

    # --- batch tiling: 256-row tiles for v6e/v7x's 256-wide MXU, 128 on v5e;
    # at small batch split into >=2 tiles so v7x's second TensorCore has work.
    try:
        kind = jax.devices()[0].device_kind.lower()
    except Exception:
        kind = ""
    big_tile = 128 if ("v5" in kind or "v4" in kind or "v3" in kind) else 256

    Bp0 = _round_up(B, 8)
    if Bp0 >= big_tile:
        b_tile = big_tile
        Bp = _round_up(Bp0, big_tile)
    else:
        b_tile = max(8, _round_up((Bp0 + 1) // 2, 8))
        Bp = _round_up(Bp0, b_tile)

    # --- time chunking: auto-shrink so the double-buffered working set fits a
    # conservative VMEM budget (v7x has only 64 MiB per TensorCore).
    t_chunk = max(1, min(t_chunk, T))

    def _working_set(tc):
        return (2 * tc * b_tile * 3 * Hp * 2    # gi block (bf16), double-buffered
                + 2 * tc * b_tile * Hp * 4      # ann block (f32), double-buffered
                + 2 * Hp * 3 * Hp * 2           # W_hh^T (bf16), double-buffered
                + 2 * 8 * Hp * 4                # b_hh n-part (sublane-padded)
                + b_tile * Hp * 4)              # carried hidden scratch

    VMEM_BUDGET = 40 << 20
    while t_chunk > 1 and _working_set(t_chunk) > VMEM_BUDGET:
        t_chunk //= 2
    Tp = _round_up(T, t_chunk)
    vmem_limit = int(min(max(2 * _working_set(t_chunk), 32 << 20), 64 << 20))

    # Gate-blocked, zero-padded weight/bias layouts: W^T as (Hp, 3*Hp) with each
    # gate (r|z|n) in its own lane-aligned 128-multiple block.  Zero padding
    # keeps padded hidden columns identically zero through the recurrence.
    def pack_wt(w):
        wp = jnp.zeros((Hp, 3 * Hp), f32)
        for g in range(3):
            wp = wp.at[:H, g * Hp:g * Hp + H].set(
                jnp.transpose(w[g * H:(g + 1) * H, :]).astype(f32))
        return wp

    def pack_b(b):
        bp = jnp.zeros((3 * Hp,), f32)
        for g in range(3):
            bp = bp.at[g * Hp:g * Hp + H].set(b[g * H:(g + 1) * H].astype(f32))
        return bp

    wih_p = pack_wt(w_ih)
    whh_p = pack_wt(w_hh)
    bih_p = pack_b(b_ih)
    bhh_p = pack_b(b_hh)

    # --- embedding gather (time-major) + hoisted input projection: one large
    # bf16 matmul with f32 accumulation, result stored in bf16 (halves the
    # dominant HBM traffic and the gi VMEM block).
    # TODO(synk): on v5e consider fusing this projection into the kernel
    # (prefetch next chunk's x, matmul while the serial gate math runs) to
    # avoid the gi HBM write+read entirely.
    encoded = jnp.take(emb, inputs.T, axis=0).astype(f32)            # (T, B, H)
    encoded = jnp.pad(encoded, ((0, Tp - T), (0, Bp - B), (0, Hp - H)))
    # b_ih folds fully; b_hh's r/z parts fold too (sigmoid args are additive);
    # b_hh's n-part cannot (it sits inside r * (h@W_n + b_hh_n)).
    bias_fold = bih_p + bhh_p.at[2 * Hp:].set(0.0)
    gi_all = jnp.dot(encoded.reshape(Tp * Bp, Hp).astype(bf16),
                     wih_p.astype(bf16), preferred_element_type=f32)
    gi_all = (gi_all + bias_fold).astype(bf16).reshape(Tp, Bp, 3 * Hp)

    whh_bf16 = whh_p.astype(bf16)                 # bf16 operand for the MXU
    bhh_n = bhh_p[2 * Hp:3 * Hp].reshape(1, Hp)

    nb = Bp // b_tile
    nt = Tp // t_chunk

    ann_tm = pl.pallas_call(
        gru_recurrence_kernel,
        out_shape=jax.ShapeDtypeStruct((Tp, Bp, Hp), f32),
        grid_spec=pltpu.PrefetchScalarGridSpec(
            num_scalar_prefetch=0,
            grid=(nb, nt),
            in_specs=[
                # time-major gi chunk: leading-axis per-step slices are free views
                pl.BlockSpec((t_chunk, b_tile, 3 * Hp), lambda b, t: (t, b, 0)),
                # TODO(synk): single-buffer the two resident inputs below
                # (pipeline_mode=pl.Buffered(1) or a one-time DMA to scratch) to
                # reclaim the duplicate weight buffer at very large H.
                pl.BlockSpec((Hp, 3 * Hp), lambda b, t: (0, 0)),   # W_hh^T
                pl.BlockSpec((1, Hp), lambda b, t: (0, 0)),        # b_hh n-part
            ],
            out_specs=pl.BlockSpec((t_chunk, b_tile, Hp),
                                   lambda b, t: (t, b, 0)),        # annotations
            scratch_shapes=[pltpu.VMEM((b_tile, Hp), f32)],        # carried hidden
        ),
        compiler_params=pltpu.CompilerParams(
            dimension_semantics=("parallel", "arbitrary"),  # batch ||, time seq
            vmem_limit_bytes=vmem_limit),
    )(gi_all, whh_bf16, bhh_n)

    # Return to the module's (B, T, H) layout; final hidden = last real timestep.
    annotations = jnp.transpose(ann_tm[:T, :B, :H], (1, 0, 2))
    hidden = ann_tm[T - 1, :B, :H]
    return annotations, hidden


def _reference_forward(inputs, emb, w_ih, w_hh, b_ih, b_hh):
    """Plain-JAX f32 reference (mirrors torch.nn.GRUCell) for correctness."""
    B, T = inputs.shape
    H = emb.shape[1]
    encoded = jnp.take(emb, inputs, axis=0).astype(jnp.float32)     # (B, T, H)

    def step(h, x):
        gi = x @ w_ih.T + b_ih
        gh = h @ w_hh.T + b_hh
        i_r, i_z, i_n = gi[:, :H], gi[:, H:2 * H], gi[:, 2 * H:]
        h_r, h_z, h_n = gh[:, :H], gh[:, H:2 * H], gh[:, 2 * H:]
        r = jax.nn.sigmoid(i_r + h_r)
        z = jax.nn.sigmoid(i_z + h_z)
        n = jnp.tanh(i_n + r * h_n)
        h_new = (1.0 - z) * n + z * h
        return h_new, h_new

    h0 = jnp.zeros((B, H), jnp.float32)
    h_final, anns = lax.scan(step, h0, jnp.transpose(encoded, (1, 0, 2)))
    return jnp.transpose(anns, (1, 0, 2)), h_final


def _run_case(key, vocab_size, hidden_size, batch_size, seq_len, tol):
    k_in, k_emb, k_wih, k_whh, k_bih, k_bhh = jax.random.split(key, 6)
    bound = 1.0 / np.sqrt(hidden_size)
    inputs = jax.random.randint(k_in, (batch_size, seq_len), 0, vocab_size,
                                dtype=jnp.int32)
    emb = jax.random.normal(k_emb, (vocab_size, hidden_size), jnp.float32)
    w_ih = jax.random.uniform(k_wih, (3 * hidden_size, hidden_size),
                              jnp.float32, -bound, bound)
    w_hh = jax.random.uniform(k_whh, (3 * hidden_size, hidden_size),
                              jnp.float32, -bound, bound)
    b_ih = jax.random.uniform(k_bih, (3 * hidden_size,), jnp.float32,
                              -bound, bound)
    b_hh = jax.random.uniform(k_bhh, (3 * hidden_size,), jnp.float32,
                              -bound, bound)

    annotations, hidden = jax.jit(gru_encoder_forward)(
        inputs, emb, w_ih, w_hh, b_ih, b_hh)
    jax.block_until_ready((annotations, hidden))

    ann_ref, hid_ref = _reference_forward(inputs, emb, w_ih, w_hh, b_ih, b_hh)
    # bf16 operands (gi + recurrent matmul) vs f32 reference -> loosened tol.
    np.testing.assert_allclose(np.asarray(annotations), np.asarray(ann_ref),
                               rtol=tol, atol=tol)
    np.testing.assert_allclose(np.asarray(hidden), np.asarray(hid_ref),
                               rtol=tol, atol=tol)
    assert annotations.shape == (batch_size, seq_len, hidden_size)
    assert hidden.shape == (batch_size, hidden_size)


if __name__ == "__main__":
    key = jax.random.PRNGKey(0)
    k1, k2 = jax.random.split(key)
    # Small config at the module's intended scale (B=2, T=8, H=32): nb=nt=1.
    _run_case(k1, vocab_size=20, hidden_size=32, batch_size=2, seq_len=8,
              tol=2e-2)
    # Larger config exercising multiple batch tiles (nb>=2) and multiple time
    # chunks (cross-chunk h_scr carry); looser tol for bf16 drift over T=40.
    _run_case(k2, vocab_size=50, hidden_size=48, batch_size=20, seq_len=40,
              tol=3e-2)
    print("KERNEL_OK")
</pallas_src>

<mosaic_0001>
module attributes {stable_mosaic.version = 11 : i64} {
  func.func @gru_recurrence_kernel(%arg0: i32, %arg1: i32, %arg2: memref<8x8x384xbf16, #tpu.memory_space<vmem>>, %arg3: memref<128x384xbf16, #tpu.memory_space<vmem>>, %arg4: memref<1x128xf32, #tpu.memory_space<vmem>>, %arg5: memref<8x8x128xf32, #tpu.memory_space<vmem>>, %arg6: memref<8x128xf32, #tpu.memory_space<vmem>>) attributes {dimension_semantics = [#tpu.dimension_semantics<parallel>, #tpu.dimension_semantics<arbitrary>], iteration_bounds = array<i64: 1, 1>, scalar_prefetch = 0 : i64, scratch_operands = 1 : i64, tpu.core_type = #tpu.core_type<tc>, window_params = [{transform_indices = @transform_0, window_bounds = array<i64: 8, 8, 384>}, {pipeline_mode = #tpu.pipeline_mode<synchronous>, transform_indices = @transform_1, window_bounds = array<i64: 128, 384>}, {pipeline_mode = #tpu.pipeline_mode<synchronous>, transform_indices = @transform_2, window_bounds = array<i64: 1, 128>}, {transform_indices = @transform_3, window_bounds = array<i64: 8, 8, 128>}]} {
    %c0_i32 = arith.constant 0 : i32
    %0 = arith.cmpi eq, %arg1, %c0_i32 : i32
    %1 = arith.extui %0 : i1 to i32
    %c0_i32_0 = arith.constant 0 : i32
    %2 = arith.cmpi ne, %1, %c0_i32_0 : i32
    scf.if %2 {
      %cst_80 = arith.constant 0.000000e+00 : f32
      %289 = vector.broadcast %cst_80 : f32 to vector<8x128xf32>
      %c0_81 = arith.constant 0 : index
      %c0_82 = arith.constant 0 : index
      %290 = vector.load %arg6[%c0_81, %c0_82] : memref<8x128xf32, #tpu.memory_space<vmem>>, vector<8x128xf32>
      tpu.vector_store %arg6[%c0_81, %c0_82], %289 {strides = array<i32>} : memref<8x128xf32, #tpu.memory_space<vmem>>, vector<8x128xf32>,
    } else {
    }
    %c0 = arith.constant 0 : index
    %c0_1 = arith.constant 0 : index
    %3 = vector.load %arg3[%c0, %c0_1] : memref<128x384xbf16, #tpu.memory_space<vmem>>, vector<128x384xbf16>
    %c0_2 = arith.constant 0 : index
    %c0_3 = arith.constant 0 : index
    %4 = vector.load %arg4[%c0_2, %c0_3] : memref<1x128xf32, #tpu.memory_space<vmem>>, vector<1x128xf32>
    %5 = vector.shape_cast %4 : vector<1x128xf32> to vector<1x128xf32>
    %6 = vector.broadcast %5 : vector<1x128xf32> to vector<8x128xf32>
    %c0_4 = arith.constant 0 : index
    %c0_5 = arith.constant 0 : index
    %7 = vector.load %arg6[%c0_4, %c0_5] : memref<8x128xf32, #tpu.memory_space<vmem>>, vector<8x128xf32>
    %c0_6 = arith.constant 0 : index
    %c0_7 = arith.constant 0 : index
    %c0_8 = arith.constant 0 : index
    %8 = vector.load %arg2[%c0_6, %c0_7, %c0_8] : memref<8x8x384xbf16, #tpu.memory_space<vmem>>, vector<1x8x384xbf16>
    %9 = vector.shape_cast %8 : vector<1x8x384xbf16> to vector<8x384xbf16>
    %10 = arith.extf %9 : vector<8x384xbf16> to vector<8x384xf32>
    %11 = arith.truncf %7 : vector<8x128xf32> to vector<8x128xbf16>
    %cst = arith.constant dense<0.000000e+00> : vector<8x384xf32>
    %12 = tpu.matmul %11, %3, %cst {dimension_numbers = #tpu.dot_dimension_numbers<[1], [0], [0], [1], [0, 0, 1, 1], [], []>} : vector<8x128xbf16>, vector<128x384xbf16>, vector<8x384xf32> -> vector<8x384xf32>
    %13 = vector.extract_strided_slice %10 {offsets = [0, 0], sizes = [8, 128], strides = [1, 1]} : vector<8x384xf32> to vector<8x128xf32>
    %14 = vector.extract_strided_slice %12 {offsets = [0, 0], sizes = [8, 128], strides = [1, 1]} : vector<8x384xf32> to vector<8x128xf32>
    %15 = arith.addf %13, %14 : vector<8x128xf32>
    %16 = arith.negf %15 : vector<8x128xf32>
    %17 = math.exp %16 : vector<8x128xf32>
    %cst_9 = arith.constant 1.000000e+00 : f32
    %18 = vector.broadcast %cst_9 : f32 to vector<8x128xf32>
    %19 = arith.addf %18, %17 : vector<8x128xf32>
    %20 = arith.divf %18, %19 : vector<8x128xf32>
    %21 = vector.extract_strided_slice %10 {offsets = [0, 128], sizes = [8, 128], strides = [1, 1]} : vector<8x384xf32> to vector<8x128xf32>
    %22 = vector.extract_strided_slice %12 {offsets = [0, 128], sizes = [8, 128], strides = [1, 1]} : vector<8x384xf32> to vector<8x128xf32>
    %23 = arith.addf %21, %22 : vector<8x128xf32>
    %24 = arith.negf %23 : vector<8x128xf32>
    %25 = math.exp %24 : vector<8x128xf32>
    %cst_10 = arith.constant 1.000000e+00 : f32
    %26 = vector.broadcast %cst_10 : f32 to vector<8x128xf32>
    %27 = arith.addf %26, %25 : vector<8x128xf32>
    %28 = arith.divf %26, %27 : vector<8x128xf32>
    %29 = vector.extract_strided_slice %10 {offsets = [0, 256], sizes = [8, 128], strides = [1, 1]} : vector<8x384xf32> to vector<8x128xf32>
    %30 = vector.extract_strided_slice %12 {offsets = [0, 256], sizes = [8, 128], strides = [1, 1]} : vector<8x384xf32> to vector<8x128xf32>
    %31 = arith.addf %30, %6 : vector<8x128xf32>
    %32 = arith.mulf %20, %31 : vector<8x128xf32>
    %33 = arith.addf %29, %32 : vector<8x128xf32>
    %34 = math.tanh %33 : vector<8x128xf32>
    %cst_11 = arith.constant 1.000000e+00 : f32
    %35 = vector.broadcast %cst_11 : f32 to vector<8x128xf32>
    %36 = arith.subf %35, %28 : vector<8x128xf32>
    %37 = arith.mulf %36, %34 : vector<8x128xf32>
    %38 = arith.mulf %28, %7 : vector<8x128xf32>
    %39 = arith.addf %37, %38 : vector<8x128xf32>
    %c0_12 = arith.constant 0 : index
    %c0_13 = arith.constant 0 : index
    %c0_14 = arith.constant 0 : index
    %40 = vector.load %arg5[%c0_12, %c0_13, %c0_14] : memref<8x8x128xf32, #tpu.memory_space<vmem>>, vector<1x8x128xf32>
    %41 = vector.shape_cast %40 : vector<1x8x128xf32> to vector<8x128xf32>
    %42 = vector.shape_cast %39 : vector<8x128xf32> to vector<1x8x128xf32>
    tpu.vector_store %arg5[%c0_12, %c0_13, %c0_14], %42 {strides = array<i32>} : memref<8x8x128xf32, #tpu.memory_space<vmem>>, vector<1x8x128xf32>,
    %c1 = arith.constant 1 : index
    %c0_15 = arith.constant 0 : index
    %c0_16 = arith.constant 0 : index
    %43 = vector.load %arg2[%c1, %c0_15, %c0_16] : memref<8x8x384xbf16, #tpu.memory_space<vmem>>, vector<1x8x384xbf16>
    %44 = vector.shape_cast %43 : vector<1x8x384xbf16> to vector<8x384xbf16>
    %45 = arith.extf %44 : vector<8x384xbf16> to vector<8x384xf32>
    %46 = arith.truncf %39 : vector<8x128xf32> to vector<8x128xbf16>
    %cst_17 = arith.constant dense<0.000000e+00> : vector<8x384xf32>
    %47 = tpu.matmul %46, %3, %cst_17 {dimension_numbers = #tpu.dot_dimension_numbers<[1], [0], [0], [1], [0, 0, 1, 1], [], []>} : vector<8x128xbf16>, vector<128x384xbf16>, vector<8x384xf32> -> vector<8x384xf32>
    %48 = vector.extract_strided_slice %45 {offsets = [0, 0], sizes = [8, 128], strides = [1, 1]} : vector<8x384xf32> to vector<8x128xf32>
    %49 = vector.extract_strided_slice %47 {offsets = [0, 0], sizes = [8, 128], strides = [1, 1]} : vector<8x384xf32> to vector<8x128xf32>
    %50 = arith.addf %48, %49 : vector<8x128xf32>
    %51 = arith.negf %50 : vector<8x128xf32>
    %52 = math.exp %51 : vector<8x128xf32>
    %cst_18 = arith.constant 1.000000e+00 : f32
    %53 = vector.broadcast %cst_18 : f32 to vector<8x128xf32>
    %54 = arith.addf %53, %52 : vector<8x128xf32>
    %55 = arith.divf %53, %54 : vector<8x128xf32>
    %56 = vector.extract_strided_slice %45 {offsets = [0, 128], sizes = [8, 128], strides = [1, 1]} : vector<8x384xf32> to vector<8x128xf32>
    %57 = vector.extract_strided_slice %47 {offsets = [0, 128], sizes = [8, 128], strides = [1, 1]} : vector<8x384xf32> to vector<8x128xf32>
    %58 = arith.addf %56, %57 : vector<8x128xf32>
    %59 = arith.negf %58 : vector<8x128xf32>
    %60 = math.exp %59 : vector<8x128xf32>
    %cst_19 = arith.constant 1.000000e+00 : f32
    %61 = vector.broadcast %cst_19 : f32 to vector<8x128xf32>
    %62 = arith.addf %61, %60 : vector<8x128xf32>
    %63 = arith.divf %61, %62 : vector<8x128xf32>
    %64 = vector.extract_strided_slice %45 {offsets = [0, 256], sizes = [8, 128], strides = [1, 1]} : vector<8x384xf32> to vector<8x128xf32>
    %65 = vector.extract_strided_slice %47 {offsets = [0, 256], sizes = [8, 128], strides = [1, 1]} : vector<8x384xf32> to vector<8x128xf32>
    %66 = arith.addf %65, %6 : vector<8x128xf32>
    %67 = arith.mulf %55, %66 : vector<8x128xf32>
    %68 = arith.addf %64, %67 : vector<8x128xf32>
    %69 = math.tanh %68 : vector<8x128xf32>
    %cst_20 = arith.constant 1.000000e+00 : f32
    %70 = vector.broadcast %cst_20 : f32 to vector<8x128xf32>
    %71 = arith.subf %70, %63 : vector<8x128xf32>
    %72 = arith.mulf %71, %69 : vector<8x128xf32>
    %73 = arith.mulf %63, %39 : vector<8x128xf32>
    %74 = arith.addf %72, %73 : vector<8x128xf32>
    %c1_21 = arith.constant 1 : index
    %c0_22 = arith.constant 0 : index
    %c0_23 = arith.constant 0 : index
    %75 = vector.load %arg5[%c1_21, %c0_22, %c0_23] : memref<8x8x128xf32, #tpu.memory_space<vmem>>, vector<1x8x128xf32>
    %76 = vector.shape_cast %75 : vector<1x8x128xf32> to vector<8x128xf32>
    %77 = vector.shape_cast %74 : vector<8x128xf32> to vector<1x8x128xf32>
    tpu.vector_store %arg5[%c1_21, %c0_22, %c0_23], %77 {strides = array<i32>} : memref<8x8x128xf32, #tpu.memory_space<vmem>>, vector<1x8x128xf32>,
    %c2 = arith.constant 2 : index
    %c0_24 = arith.constant 0 : index
    %c0_25 = arith.constant 0 : index
    %78 = vector.load %arg2[%c2, %c0_24, %c0_25] : memref<8x8x384xbf16, #tpu.memory_space<vmem>>, vector<1x8x384xbf16>
    %79 = vector.shape_cast %78 : vector<1x8x384xbf16> to vector<8x384xbf16>
    %80 = arith.extf %79 : vector<8x384xbf16> to vector<8x384xf32>
    %81 = arith.truncf %74 : vector<8x128xf32> to vector<8x128xbf16>
    %cst_26 = arith.constant dense<0.000000e+00> : vector<8x384xf32>
    %82 = tpu.matmul %81, %3, %cst_26 {dimension_numbers = #tpu.dot_dimension_numbers<[1], [0], [0], [1], [0, 0, 1, 1], [], []>} : vector<8x128xbf16>, vector<128x384xbf16>, vector<8x384xf32> -> vector<8x384xf32>
    %83 = vector.extract_strided_slice %80 {offsets = [0, 0], sizes = [8, 128], strides = [1, 1]} : vector<8x384xf32> to vector<8x128xf32>
    %84 = vector.extract_strided_slice %82 {offsets = [0, 0], sizes = [8, 128], strides = [1, 1]} : vector<8x384xf32> to vector<8x128xf32>
    %85 = arith.addf %83, %84 : vector<8x128xf32>
    %86 = arith.negf %85 : vector<8x128xf32>
    %87 = math.exp %86 : vector<8x128xf32>
    %cst_27 = arith.constant 1.000000e+00 : f32
    %88 = vector.broadcast %cst_27 : f32 to vector<8x128xf32>
    %89 = arith.addf %88, %87 : vector<8x128xf32>
    %90 = arith.divf %88, %89 : vector<8x128xf32>
    %91 = vector.extract_strided_slice %80 {offsets = [0, 128], sizes = [8, 128], strides = [1, 1]} : vector<8x384xf32> to vector<8x128xf32>
    %92 = vector.extract_strided_slice %82 {offsets = [0, 128], sizes = [8, 128], strides = [1, 1]} : vector<8x384xf32> to vector<8x128xf32>
    %93 = arith.addf %91, %92 : vector<8x128xf32>
    %94 = arith.negf %93 : vector<8x128xf32>
    %95 = math.exp %94 : vector<8x128xf32>
    %cst_28 = arith.constant 1.000000e+00 : f32
    %96 = vector.broadcast %cst_28 : f32 to vector<8x128xf32>
    %97 = arith.addf %96, %95 : vector<8x128xf32>
    %98 = arith.divf %96, %97 : vector<8x128xf32>
    %99 = vector.extract_strided_slice %80 {offsets = [0, 256], sizes = [8, 128], strides = [1, 1]} : vector<8x384xf32> to vector<8x128xf32>
    %100 = vector.extract_strided_slice %82 {offsets = [0, 256], sizes = [8, 128], strides = [1, 1]} : vector<8x384xf32> to vector<8x128xf32>
    %101 = arith.addf %100, %6 : vector<8x128xf32>
    %102 = arith.mulf %90, %101 : vector<8x128xf32>
    %103 = arith.addf %99, %102 : vector<8x128xf32>
    %104 = math.tanh %103 : vector<8x128xf32>
    %cst_29 = arith.constant 1.000000e+00 : f32
    %105 = vector.broadcast %cst_29 : f32 to vector<8x128xf32>
    %106 = arith.subf %105, %98 : vector<8x128xf32>
    %107 = arith.mulf %106, %104 : vector<8x128xf32>
    %108 = arith.mulf %98, %74 : vector<8x128xf32>
    %109 = arith.addf %107, %108 : vector<8x128xf32>
    %c2_30 = arith.constant 2 : index
    %c0_31 = arith.constant 0 : index
    %c0_32 = arith.constant 0 : index
    %110 = vector.load %arg5[%c2_30, %c0_31, %c0_32] : memref<8x8x128xf32, #tpu.memory_space<vmem>>, vector<1x8x128xf32>
    %111 = vector.shape_cast %110 : vector<1x8x128xf32> to vector<8x128xf32>
    %112 = vector.shape_cast %109 : vector<8x128xf32> to vector<1x8x128xf32>
    tpu.vector_store %arg5[%c2_30, %c0_31, %c0_32], %112 {strides = array<i32>} : memref<8x8x128xf32, #tpu.memory_space<vmem>>, vector<1x8x128xf32>,
    %c3 = arith.constant 3 : index
    %c0_33 = arith.constant 0 : index
    %c0_34 = arith.constant 0 : index
    %113 = vector.load %arg2[%c3, %c0_33, %c0_34] : memref<8x8x384xbf16, #tpu.memory_space<vmem>>, vector<1x8x384xbf16>
    %114 = vector.shape_cast %113 : vector<1x8x384xbf16> to vector<8x384xbf16>
    %115 = arith.extf %114 : vector<8x384xbf16> to vector<8x384xf32>
    %116 = arith.truncf %109 : vector<8x128xf32> to vector<8x128xbf16>
    %cst_35 = arith.constant dense<0.000000e+00> : vector<8x384xf32>
    %117 = tpu.matmul %116, %3, %cst_35 {dimension_numbers = #tpu.dot_dimension_numbers<[1], [0], [0], [1], [0, 0, 1, 1], [], []>} : vector<8x128xbf16>, vector<128x384xbf16>, vector<8x384xf32> -> vector<8x384xf32>
    %118 = vector.extract_strided_slice %115 {offsets = [0, 0], sizes = [8, 128], strides = [1, 1]} : vector<8x384xf32> to vector<8x128xf32>
    %119 = vector.extract_strided_slice %117 {offsets = [0, 0], sizes = [8, 128], strides = [1, 1]} : vector<8x384xf32> to vector<8x128xf32>
    %120 = arith.addf %118, %119 : vector<8x128xf32>
    %121 = arith.negf %120 : vector<8x128xf32>
    %122 = math.exp %121 : vector<8x128xf32>
    %cst_36 = arith.constant 1.000000e+00 : f32
    %123 = vector.broadcast %cst_36 : f32 to vector<8x128xf32>
    %124 = arith.addf %123, %122 : vector<8x128xf32>
    %125 = arith.divf %123, %124 : vector<8x128xf32>
    %126 = vector.extract_strided_slice %115 {offsets = [0, 128], sizes = [8, 128], strides = [1, 1]} : vector<8x384xf32> to vector<8x128xf32>
    %127 = vector.extract_strided_slice %117 {offsets = [0, 128], sizes = [8, 128], strides = [1, 1]} : vector<8x384xf32> to vector<8x128xf32>
    %128 = arith.addf %126, %127 : vector<8x128xf32>
    %129 = arith.negf %128 : vector<8x128xf32>
    %130 = math.exp %129 : vector<8x128xf32>
    %cst_37 = arith.constant 1.000000e+00 : f32
    %131 = vector.broadcast %cst_37 : f32 to vector<8x128xf32>
    %132 = arith.addf %131, %130 : vector<8x128xf32>
    %133 = arith.divf %131, %132 : vector<8x128xf32>
    %134 = vector.extract_strided_slice %115 {offsets = [0, 256], sizes = [8, 128], strides = [1, 1]} : vector<8x384xf32> to vector<8x128xf32>
    %135 = vector.extract_strided_slice %117 {offsets = [0, 256], sizes = [8, 128], strides = [1, 1]} : vector<8x384xf32> to vector<8x128xf32>
    %136 = arith.addf %135, %6 : vector<8x128xf32>
    %137 = arith.mulf %125, %136 : vector<8x128xf32>
    %138 = arith.addf %134, %137 : vector<8x128xf32>
    %139 = math.tanh %138 : vector<8x128xf32>
    %cst_38 = arith.constant 1.000000e+00 : f32
    %140 = vector.broadcast %cst_38 : f32 to vector<8x128xf32>
    %141 = arith.subf %140, %133 : vector<8x128xf32>
    %142 = arith.mulf %141, %139 : vector<8x128xf32>
    %143 = arith.mulf %133, %109 : vector<8x128xf32>
    %144 = arith.addf %142, %143 : vector<8x128xf32>
    %c3_39 = arith.constant 3 : index
    %c0_40 = arith.constant 0 : index
    %c0_41 = arith.constant 0 : index
    %145 = vector.load %arg5[%c3_39, %c0_40, %c0_41] : memref<8x8x128xf32, #tpu.memory_space<vmem>>, vector<1x8x128xf32>
    %146 = vector.shape_cast %145 : vector<1x8x128xf32> to vector<8x128xf32>
    %147 = vector.shape_cast %144 : vector<8x128xf32> to vector<1x8x128xf32>
    tpu.vector_store %arg5[%c3_39, %c0_40, %c0_41], %147 {strides = array<i32>} : memref<8x8x128xf32, #tpu.memory_space<vmem>>, vector<1x8x128xf32>,
    %c4 = arith.constant 4 : index
    %c0_42 = arith.constant 0 : index
    %c0_43 = arith.constant 0 : index
    %148 = vector.load %arg2[%c4, %c0_42, %c0_43] : memref<8x8x384xbf16, #tpu.memory_space<vmem>>, vector<1x8x384xbf16>
    %149 = vector.shape_cast %148 : vector<1x8x384xbf16> to vector<8x384xbf16>
    %150 = arith.extf %149 : vector<8x384xbf16> to vector<8x384xf32>
    %151 = arith.truncf %144 : vector<8x128xf32> to vector<8x128xbf16>
    %cst_44 = arith.constant dense<0.000000e+00> : vector<8x384xf32>
    %152 = tpu.matmul %151, %3, %cst_44 {dimension_numbers = #tpu.dot_dimension_numbers<[1], [0], [0], [1], [0, 0, 1, 1], [], []>} : vector<8x128xbf16>, vector<128x384xbf16>, vector<8x384xf32> -> vector<8x384xf32>
    %153 = vector.extract_strided_slice %150 {offsets = [0, 0], sizes = [8, 128], strides = [1, 1]} : vector<8x384xf32> to vector<8x128xf32>
    %154 = vector.extract_strided_slice %152 {offsets = [0, 0], sizes = [8, 128], strides = [1, 1]} : vector<8x384xf32> to vector<8x128xf32>
    %155 = arith.addf %153, %154 : vector<8x128xf32>
    %156 = arith.negf %155 : vector<8x128xf32>
    %157 = math.exp %156 : vector<8x128xf32>
    %cst_45 = arith.constant 1.000000e+00 : f32
    %158 = vector.broadcast %cst_45 : f32 to vector<8x128xf32>
    %159 = arith.addf %158, %157 : vector<8x128xf32>
    %160 = arith.divf %158, %159 : vector<8x128xf32>
    %161 = vector.extract_strided_slice %150 {offsets = [0, 128], sizes = [8, 128], strides = [1, 1]} : vector<8x384xf32> to vector<8x128xf32>
    %162 = vector.extract_strided_slice %152 {offsets = [0, 128], sizes = [8, 128], strides = [1, 1]} : vector<8x384xf32> to vector<8x128xf32>
    %163 = arith.addf %161, %162 : vector<8x128xf32>
    %164 = arith.negf %163 : vector<8x128xf32>
    %165 = math.exp %164 : vector<8x128xf32>
    %cst_46 = arith.constant 1.000000e+00 : f32
    %166 = vector.broadcast %cst_46 : f32 to vector<8x128xf32>
    %167 = arith.addf %166, %165 : vector<8x128xf32>
    %168 = arith.divf %166, %167 : vector<8x128xf32>
    %169 = vector.extract_strided_slice %150 {offsets = [0, 256], sizes = [8, 128], strides = [1, 1]} : vector<8x384xf32> to vector<8x128xf32>
    %170 = vector.extract_strided_slice %152 {offsets = [0, 256], sizes = [8, 128], strides = [1, 1]} : vector<8x384xf32> to vector<8x128xf32>
    %171 = arith.addf %170, %6 : vector<8x128xf32>
    %172 = arith.mulf %160, %171 : vector<8x128xf32>
    %173 = arith.addf %169, %172 : vector<8x128xf32>
    %174 = math.tanh %173 : vector<8x128xf32>
    %cst_47 = arith.constant 1.000000e+00 : f32
    %175 = vector.broadcast %cst_47 : f32 to vector<8x128xf32>
    %176 = arith.subf %175, %168 : vector<8x128xf32>
    %177 = arith.mulf %176, %174 : vector<8x128xf32>
    %178 = arith.mulf %168, %144 : vector<8x128xf32>
    %179 = arith.addf %177, %178 : vector<8x128xf32>
    %c4_48 = arith.constant 4 : index
    %c0_49 = arith.constant 0 : index
    %c0_50 = arith.constant 0 : index
    %180 = vector.load %arg5[%c4_48, %c0_49, %c0_50] : memref<8x8x128xf32, #tpu.memory_space<vmem>>, vector<1x8x128xf32>
    %181 = vector.shape_cast %180 : vector<1x8x128xf32> to vector<8x128xf32>
    %182 = vector.shape_cast %179 : vector<8x128xf32> to vector<1x8x128xf32>
    tpu.vector_store %arg5[%c4_48, %c0_49, %c0_50], %182 {strides = array<i32>} : memref<8x8x128xf32, #tpu.memory_space<vmem>>, vector<1x8x128xf32>,
    %c5 = arith.constant 5 : index
    %c0_51 = arith.constant 0 : index
    %c0_52 = arith.constant 0 : index
    %183 = vector.load %arg2[%c5, %c0_51, %c0_52] : memref<8x8x384xbf16, #tpu.memory_space<vmem>>, vector<1x8x384xbf16>
    %184 = vector.shape_cast %183 : vector<1x8x384xbf16> to vector<8x384xbf16>
    %185 = arith.extf %184 : vector<8x384xbf16> to vector<8x384xf32>
    %186 = arith.truncf %179 : vector<8x128xf32> to vector<8x128xbf16>
    %cst_53 = arith.constant dense<0.000000e+00> : vector<8x384xf32>
    %187 = tpu.matmul %186, %3, %cst_53 {dimension_numbers = #tpu.dot_dimension_numbers<[1], [0], [0], [1], [0, 0, 1, 1], [], []>} : vector<8x128xbf16>, vector<128x384xbf16>, vector<8x384xf32> -> vector<8x384xf32>
    %188 = vector.extract_strided_slice %185 {offsets = [0, 0], sizes = [8, 128], strides = [1, 1]} : vector<8x384xf32> to vector<8x128xf32>
    %189 = vector.extract_strided_slice %187 {offsets = [0, 0], sizes = [8, 128], strides = [1, 1]} : vector<8x384xf32> to vector<8x128xf32>
    %190 = arith.addf %188, %189 : vector<8x128xf32>
    %191 = arith.negf %190 : vector<8x128xf32>
    %192 = math.exp %191 : vector<8x128xf32>
    %cst_54 = arith.constant 1.000000e+00 : f32
    %193 = vector.broadcast %cst_54 : f32 to vector<8x128xf32>
    %194 = arith.addf %193, %192 : vector<8x128xf32>
    %195 = arith.divf %193, %194 : vector<8x128xf32>
    %196 = vector.extract_strided_slice %185 {offsets = [0, 128], sizes = [8, 128], strides = [1, 1]} : vector<8x384xf32> to vector<8x128xf32>
    %197 = vector.extract_strided_slice %187 {offsets = [0, 128], sizes = [8, 128], strides = [1, 1]} : vector<8x384xf32> to vector<8x128xf32>
    %198 = arith.addf %196, %197 : vector<8x128xf32>
    %199 = arith.negf %198 : vector<8x128xf32>
    %200 = math.exp %199 : vector<8x128xf32>
    %cst_55 = arith.constant 1.000000e+00 : f32
    %201 = vector.broadcast %cst_55 : f32 to vector<8x128xf32>
    %202 = arith.addf %201, %200 : vector<8x128xf32>
    %203 = arith.divf %201, %202 : vector<8x128xf32>
    %204 = vector.extract_strided_slice %185 {offsets = [0, 256], sizes = [8, 128], strides = [1, 1]} : vector<8x384xf32> to vector<8x128xf32>
    %205 = vector.extract_strided_slice %187 {offsets = [0, 256], sizes = [8, 128], strides = [1, 1]} : vector<8x384xf32> to vector<8x128xf32>
    %206 = arith.addf %205, %6 : vector<8x128xf32>
    %207 = arith.mulf %195, %206 : vector<8x128xf32>
    %208 = arith.addf %204, %207 : vector<8x128xf32>
    %209 = math.tanh %208 : vector<8x128xf32>
    %cst_56 = arith.constant 1.000000e+00 : f32
    %210 = vector.broadcast %cst_56 : f32 to vector<8x128xf32>
    %211 = arith.subf %210, %203 : vector<8x128xf32>
    %212 = arith.mulf %211, %209 : vector<8x128xf32>
    %213 = arith.mulf %203, %179 : vector<8x128xf32>
    %214 = arith.addf %212, %213 : vector<8x128xf32>
    %c5_57 = arith.constant 5 : index
    %c0_58 = arith.constant 0 : index
    %c0_59 = arith.constant 0 : index
    %215 = vector.load %arg5[%c5_57, %c0_58, %c0_59] : memref<8x8x128xf32, #tpu.memory_space<vmem>>, vector<1x8x128xf32>
    %216 = vector.shape_cast %215 : vector<1x8x128xf32> to vector<8x128xf32>
    %217 = vector.shape_cast %214 : vector<8x128xf32> to vector<1x8x128xf32>
    tpu.vector_store %arg5[%c5_57, %c0_58, %c0_59], %217 {strides = array<i32>} : memref<8x8x128xf32, #tpu.memory_space<vmem>>, vector<1x8x128xf32>,
    %c6 = arith.constant 6 : index
    %c0_60 = arith.constant 0 : index
    %c0_61 = arith.constant 0 : index
    %218 = vector.load %arg2[%c6, %c0_60, %c0_61] : memref<8x8x384xbf16, #tpu.memory_space<vmem>>, vector<1x8x384xbf16>
    %219 = vector.shape_cast %218 : vector<1x8x384xbf16> to vector<8x384xbf16>
    %220 = arith.extf %219 : vector<8x384xbf16> to vector<8x384xf32>
    %221 = arith.truncf %214 : vector<8x128xf32> to vector<8x128xbf16>
    %cst_62 = arith.constant dense<0.000000e+00> : vector<8x384xf32>
    %222 = tpu.matmul %221, %3, %cst_62 {dimension_numbers = #tpu.dot_dimension_numbers<[1], [0], [0], [1], [0, 0, 1, 1], [], []>} : vector<8x128xbf16>, vector<128x384xbf16>, vector<8x384xf32> -> vector<8x384xf32>
    %223 = vector.extract_strided_slice %220 {offsets = [0, 0], sizes = [8, 128], strides = [1, 1]} : vector<8x384xf32> to vector<8x128xf32>
    %224 = vector.extract_strided_slice %222 {offsets = [0, 0], sizes = [8, 128], strides = [1, 1]} : vector<8x384xf32> to vector<8x128xf32>
    %225 = arith.addf %223, %224 : vector<8x128xf32>
    %226 = arith.negf %225 : vector<8x128xf32>
    %227 = math.exp %226 : vector<8x128xf32>
    %cst_63 = arith.constant 1.000000e+00 : f32
    %228 = vector.broadcast %cst_63 : f32 to vector<8x128xf32>
    %229 = arith.addf %228, %227 : vector<8x128xf32>
    %230 = arith.divf %228, %229 : vector<8x128xf32>
    %231 = vector.extract_strided_slice %220 {offsets = [0, 128], sizes = [8, 128], strides = [1, 1]} : vector<8x384xf32> to vector<8x128xf32>
    %232 = vector.extract_strided_slice %222 {offsets = [0, 128], sizes = [8, 128], strides = [1, 1]} : vector<8x384xf32> to vector<8x128xf32>
    %233 = arith.addf %231, %232 : vector<8x128xf32>
    %234 = arith.negf %233 : vector<8x128xf32>
    %235 = math.exp %234 : vector<8x128xf32>
    %cst_64 = arith.constant 1.000000e+00 : f32
    %236 = vector.broadcast %cst_64 : f32 to vector<8x128xf32>
    %237 = arith.addf %236, %235 : vector<8x128xf32>
    %238 = arith.divf %236, %237 : vector<8x128xf32>
    %239 = vector.extract_strided_slice %220 {offsets = [0, 256], sizes = [8, 128], strides = [1, 1]} : vector<8x384xf32> to vector<8x128xf32>
    %240 = vector.extract_strided_slice %222 {offsets = [0, 256], sizes = [8, 128], strides = [1, 1]} : vector<8x384xf32> to vector<8x128xf32>
    %241 = arith.addf %240, %6 : vector<8x128xf32>
    %242 = arith.mulf %230, %241 : vector<8x128xf32>
    %243 = arith.addf %239, %242 : vector<8x128xf32>
    %244 = math.tanh %243 : vector<8x128xf32>
    %cst_65 = arith.constant 1.000000e+00 : f32
    %245 = vector.broadcast %cst_65 : f32 to vector<8x128xf32>
    %246 = arith.subf %245, %238 : vector<8x128xf32>
    %247 = arith.mulf %246, %244 : vector<8x128xf32>
    %248 = arith.mulf %238, %214 : vector<8x128xf32>
    %249 = arith.addf %247, %248 : vector<8x128xf32>
    %c6_66 = arith.constant 6 : index
    %c0_67 = arith.constant 0 : index
    %c0_68 = arith.constant 0 : index
    %250 = vector.load %arg5[%c6_66, %c0_67, %c0_68] : memref<8x8x128xf32, #tpu.memory_space<vmem>>, vector<1x8x128xf32>
    %251 = vector.shape_cast %250 : vector<1x8x128xf32> to vector<8x128xf32>
    %252 = vector.shape_cast %249 : vector<8x128xf32> to vector<1x8x128xf32>
    tpu.vector_store %arg5[%c6_66, %c0_67, %c0_68], %252 {strides = array<i32>} : memref<8x8x128xf32, #tpu.memory_space<vmem>>, vector<1x8x128xf32>,
    %c7 = arith.constant 7 : index
    %c0_69 = arith.constant 0 : index
    %c0_70 = arith.constant 0 : index
    %253 = vector.load %arg2[%c7, %c0_69, %c0_70] : memref<8x8x384xbf16, #tpu.memory_space<vmem>>, vector<1x8x384xbf16>
    %254 = vector.shape_cast %253 : vector<1x8x384xbf16> to vector<8x384xbf16>
    %255 = arith.extf %254 : vector<8x384xbf16> to vector<8x384xf32>
    %256 = arith.truncf %249 : vector<8x128xf32> to vector<8x128xbf16>
    %cst_71 = arith.constant dense<0.000000e+00> : vector<8x384xf32>
    %257 = tpu.matmul %256, %3, %cst_71 {dimension_numbers = #tpu.dot_dimension_numbers<[1], [0], [0], [1], [0, 0, 1, 1], [], []>} : vector<8x128xbf16>, vector<128x384xbf16>, vector<8x384xf32> -> vector<8x384xf32>
    %258 = vector.extract_strided_slice %255 {offsets = [0, 0], sizes = [8, 128], strides = [1, 1]} : vector<8x384xf32> to vector<8x128xf32>
    %259 = vector.extract_strided_slice %257 {offsets = [0, 0], sizes = [8, 128], strides = [1, 1]} : vector<8x384xf32> to vector<8x128xf32>
    %260 = arith.addf %258, %259 : vector<8x128xf32>
    %261 = arith.negf %260 : vector<8x128xf32>
    %262 = math.exp %261 : vector<8x128xf32>
    %cst_72 = arith.constant 1.000000e+00 : f32
    %263 = vector.broadcast %cst_72 : f32 to vector<8x128xf32>
    %264 = arith.addf %263, %262 : vector<8x128xf32>
    %265 = arith.divf %263, %264 : vector<8x128xf32>
    %266 = vector.extract_strided_slice %255 {offsets = [0, 128], sizes = [8, 128], strides = [1, 1]} : vector<8x384xf32> to vector<8x128xf32>
    %267 = vector.extract_strided_slice %257 {offsets = [0, 128], sizes = [8, 128], strides = [1, 1]} : vector<8x384xf32> to vector<8x128xf32>
    %268 = arith.addf %266, %267 : vector<8x128xf32>
    %269 = arith.negf %268 : vector<8x128xf32>
    %270 = math.exp %269 : vector<8x128xf32>
    %cst_73 = arith.constant 1.000000e+00 : f32
    %271 = vector.broadcast %cst_73 : f32 to vector<8x128xf32>
    %272 = arith.addf %271, %270 : vector<8x128xf32>
    %273 = arith.divf %271, %272 : vector<8x128xf32>
    %274 = vector.extract_strided_slice %255 {offsets = [0, 256], sizes = [8, 128], strides = [1, 1]} : vector<8x384xf32> to vector<8x128xf32>
    %275 = vector.extract_strided_slice %257 {offsets = [0, 256], sizes = [8, 128], strides = [1, 1]} : vector<8x384xf32> to vector<8x128xf32>
    %276 = arith.addf %275, %6 : vector<8x128xf32>
    %277 = arith.mulf %265, %276 : vector<8x128xf32>
    %278 = arith.addf %274, %277 : vector<8x128xf32>
    %279 = math.tanh %278 : vector<8x128xf32>
    %cst_74 = arith.constant 1.000000e+00 : f32
    %280 = vector.broadcast %cst_74 : f32 to vector<8x128xf32>
    %281 = arith.subf %280, %273 : vector<8x128xf32>
    %282 = arith.mulf %281, %279 : vector<8x128xf32>
    %283 = arith.mulf %273, %249 : vector<8x128xf32>
    %284 = arith.addf %282, %283 : vector<8x128xf32>
    %c7_75 = arith.constant 7 : index
    %c0_76 = arith.constant 0 : index
    %c0_77 = arith.constant 0 : index
    %285 = vector.load %arg5[%c7_75, %c0_76, %c0_77] : memref<8x8x128xf32, #tpu.memory_space<vmem>>, vector<1x8x128xf32>
    %286 = vector.shape_cast %285 : vector<1x8x128xf32> to vector<8x128xf32>
    %287 = vector.shape_cast %284 : vector<8x128xf32> to vector<1x8x128xf32>
    tpu.vector_store %arg5[%c7_75, %c0_76, %c0_77], %287 {strides = array<i32>} : memref<8x8x128xf32, #tpu.memory_space<vmem>>, vector<1x8x128xf32>,
    %c0_78 = arith.constant 0 : index
    %c0_79 = arith.constant 0 : index
    %288 = vector.load %arg6[%c0_78, %c0_79] : memref<8x128xf32, #tpu.memory_space<vmem>>, vector<8x128xf32>
    tpu.vector_store %arg6[%c0_78, %c0_79], %284 {strides = array<i32>} : memref<8x128xf32, #tpu.memory_space<vmem>>, vector<8x128xf32>,
    return
  }
  func.func @transform_0(%arg0: i32, %arg1: i32) -> (i32, i32, i32) {
    %c0_i32 = arith.constant 0 : i32
    %c0_i32_0 = arith.constant 0 : i32
    return %arg1, %arg0, %c0_i32 : i32, i32, i32
  }
  func.func @transform_1(%arg0: i32, %arg1: i32) -> (i32, i32) {
    %c0_i32 = arith.constant 0 : i32
    %c0_i32_0 = arith.constant 0 : i32
    %c0_i32_1 = arith.constant 0 : i32
    return %c0_i32, %c0_i32_0 : i32, i32
  }
  func.func @transform_2(%arg0: i32, %arg1: i32) -> (i32, i32) {
    %c0_i32 = arith.constant 0 : i32
    %c0_i32_0 = arith.constant 0 : i32
    %c0_i32_1 = arith.constant 0 : i32
    return %c0_i32, %c0_i32_0 : i32, i32
  }
  func.func @transform_3(%arg0: i32, %arg1: i32) -> (i32, i32, i32) {
    %c0_i32 = arith.constant 0 : i32
    %c0_i32_0 = arith.constant 0 : i32
    return %arg1, %arg0, %c0_i32 : i32, i32, i32
  }
}

</mosaic_0001>

<llo_original>
// kernel: gru_encoder_forward.1
$region0: #{gru_encoder_forward.1}
  #allocation0 [shape = 'u32[]', space=smem, size = 0x4, offset = 0x4, fixed_abs, tag = 'smem constant byte address 0x4 - core index']
  #allocation1 [shape = 'u32[144,128]{1,0:T(1,128)}', space=vmem, size = 0x12000, scoped, tag = 'internal scratch']
  #allocation2 [shape = 'f32[8,128]{1,0:T(8,128)}', space=vmem, size = 0x1000, scoped, tag = 'scratch operand']
  %s0 = inlined_call_operand.vmem [shape: bf16[8,8,384], index: 0, kind: input, shape index: {}]
  %s1 = inlined_call_operand.vmem [shape: bf16[128,384], index: 1, kind: input, shape index: {}]
  %s2 = inlined_call_operand.vmem [shape: f32[1,128], index: 2, kind: input, shape index: {}]
  %s3 = inlined_call_operand.vmem [shape: f32[8,8,128], index: 3, kind: output, shape index: {}]
  %s4 = sld [smem:[#allocation0]]
  $region26: #{gru_encoder_forward.1} parent=0
    _
  %s6 = ssub.s32 1, %s4
  %s7 = scalar_select 0, %s6, %s4
  // Predicated region
  $region2: #{gru_encoder_forward.1} parent=0 // pred_check
    _
  $region3: #{gru_encoder_forward.1} parent=0 // pred_check_branch
    %9 = sbr.rel (0) target = $region5
  $region4: #{gru_encoder_forward.1} parent=0 // pred_region
    _
  $region5: #{gru_encoder_forward.1} parent=0 // pred_fallthru
    _
  // Predicated region
  $region6: #{gru_encoder_forward.1} parent=0 // pred_check
    _
  $region7: #{gru_encoder_forward.1} parent=0 // pred_check_branch
    %11 = sbr.rel (0) target = $region9
  $region8: #{gru_encoder_forward.1} parent=0 // pred_region
    _
  $region9: #{gru_encoder_forward.1} parent=0 // pred_fallthru
    _
  // Predicated region
  $region10: #{gru_encoder_forward.1} parent=0 // pred_check
    _
  $region11: #{gru_encoder_forward.1} parent=0 // pred_check_branch
    %13 = sbr.rel (0) target = $region13
  $region12: #{gru_encoder_forward.1} parent=0 // pred_region
    _
  $region13: #{gru_encoder_forward.1} parent=0 // pred_fallthru
    _
  %p15 = scmp.eq.s32.totalorder 0, 0
  // Predicated region
  $region14: #{gru_encoder_forward.1} parent=0 // pred_check
    %p16 = pneg %p15
  $region15: #{gru_encoder_forward.1} parent=0 // pred_check_branch
    %18 = sbr.rel (%p16) target = $region17
  $region16: #{gru_encoder_forward.1} parent=0 // pred_region
    %19 = vst [vmem:[#allocation2] sm:$0xff] 0.0
  $region17: #{gru_encoder_forward.1} parent=0 // pred_fallthru
    _
  %v20 = vld [vmem:[%s1] sm:$0xff]
  %v21 = vld [vmem:[%s1 + $0x8] sm:$0xf]
  %v22 = vld [vmem:[%s1 + $0xc] sm:$0xff]
  %v23 = vld [vmem:[%s1 + $0x14] sm:$0xf]
  %v24 = vld [vmem:[%s1 + $0x18] sm:$0xff]
  %v25 = vld [vmem:[%s1 + $0x20] sm:$0xf]
  %v26 = vld [vmem:[%s1 + $0x24] sm:$0xff]
  %v27 = vld [vmem:[%s1 + $0x2c] sm:$0xf]
  %v28 = vld [vmem:[%s1 + $0x30] sm:$0xff]
  %v29 = vld [vmem:[%s1 + $0x38] sm:$0xf]
  %v30 = vld [vmem:[%s1 + $0x3c] sm:$0xff]
  %v31 = vld [vmem:[%s1 + $0x44] sm:$0xf]
  %v32 = vld [vmem:[%s1 + $0x48] sm:$0xff]
  %v33 = vld [vmem:[%s1 + $0x50] sm:$0xf]
  %v34 = vld [vmem:[%s1 + $0x54] sm:$0xff]
  %v35 = vld [vmem:[%s1 + $0x5c] sm:$0xf]
  %v36 = vld [vmem:[%s1 + $0x60] sm:$0xff]
  %v37 = vld [vmem:[%s1 + $0x68] sm:$0xf]
  %v38 = vld [vmem:[%s1 + $0x6c] sm:$0xff]
  %v39 = vld [vmem:[%s1 + $0x74] sm:$0xf]
  %v40 = vld [vmem:[%s1 + $0x78] sm:$0xff]
  %v41 = vld [vmem:[%s1 + $0x80] sm:$0xf]
  %v42 = vld [vmem:[%s1 + $0x84] sm:$0xff]
  %v43 = vld [vmem:[%s1 + $0x8c] sm:$0xf]
  %v44 = vld [vmem:[%s1 + $0x90] sm:$0xff]
  %v45 = vld [vmem:[%s1 + $0x98] sm:$0xf]
  %v46 = vld [vmem:[%s1 + $0x9c] sm:$0xff]
  %v47 = vld [vmem:[%s1 + $0xa4] sm:$0xf]
  %v48 = vld [vmem:[%s1 + $0xa8] sm:$0xff]
  %v49 = vld [vmem:[%s1 + $0xb0] sm:$0xf]
  %v50 = vld [vmem:[%s1 + $0xb4] sm:$0xff]
  %v51 = vld [vmem:[%s1 + $0xbc] sm:$0xf]
  %v52 = vld [vmem:[%s2] sm:$0x1]
  %v54 = vlaneseq
  %v55 = vshrl.u32 %v54, 7
  %v56 = vsub.s32 0, %v55
  %v57 = vrot.slane %v52, %v56
  %v59 = vld [vmem:[#allocation2] sm:$0xff]
  %v60 = vld [vmem:[%s0] sm:$0xff]
  %v61 = vld [vmem:[%s0 + $0x8] sm:$0xf]
  %v62 = vunpack.c.l.bf16 %v60
  %v63 = vunpack.c.h.bf16 %v60
  %v64 = vunpack.c.l.bf16 %v61
  %v65 = vpack.c.bf16 %v59, %v59
  %v98 = vunpack.c.l.b16 %v20
  %v99 = vunpack.c.h.b16 %v20
  %v100 = vunpack.c.l.b16 %v21
  %v101 = vunpack.c.l.b16 %v22
  %v102 = vunpack.c.h.b16 %v22
  %v103 = vunpack.c.l.b16 %v23
  %v104 = vunpack.c.l.b16 %v24
  %v105 = vunpack.c.h.b16 %v24
  %v106 = vunpack.c.l.b16 %v25
  %v107 = vunpack.c.l.b16 %v26
  %v108 = vunpack.c.h.b16 %v26
  %v109 = vunpack.c.l.b16 %v27
  %v110 = vunpack.c.l.b16 %v28
  %v111 = vunpack.c.h.b16 %v28
  %v112 = vunpack.c.l.b16 %v29
  %v113 = vunpack.c.l.b16 %v30
  %v114 = vunpack.c.h.b16 %v30
  %v115 = vunpack.c.l.b16 %v31
  %v116 = vunpack.c.l.b16 %v32
  %v117 = vunpack.c.h.b16 %v32
  %v118 = vunpack.c.l.b16 %v33
  %v119 = vunpack.c.l.b16 %v34
  %v120 = vunpack.c.h.b16 %v34
  %v121 = vunpack.c.l.b16 %v35
  %v122 = vunpack.c.l.b16 %v36
  %v123 = vunpack.c.h.b16 %v36
  %v124 = vunpack.c.l.b16 %v37
  %v125 = vunpack.c.l.b16 %v38
  %v126 = vunpack.c.h.b16 %v38
  %v127 = vunpack.c.l.b16 %v39
  %v128 = vunpack.c.l.b16 %v40
  %v129 = vunpack.c.h.b16 %v40
  %v130 = vunpack.c.l.b16 %v41
  %v131 = vunpack.c.l.b16 %v42
  %v132 = vunpack.c.h.b16 %v42
  %v133 = vunpack.c.l.b16 %v43
  %v134 = vunpack.c.l.b16 %v44
  %v135 = vunpack.c.h.b16 %v44
  %v136 = vunpack.c.l.b16 %v45
  %v137 = vunpack.c.l.b16 %v46
  %v138 = vunpack.c.h.b16 %v46
  %v139 = vunpack.c.l.b16 %v47
  %v140 = vunpack.c.l.b16 %v48
  %v141 = vunpack.c.h.b16 %v48
  %v142 = vunpack.c.l.b16 %v49
  %v143 = vunpack.c.l.b16 %v50
  %v144 = vunpack.c.h.b16 %v50
  %v145 = vunpack.c.l.b16 %v51
  %v146 = vpack.c.b16 %v101, %v98
  %v147 = vpack.c.b16 %v102, %v99
  %v148 = vpack.c.b16 %v103, %v100
  %v149 = vpack.c.b16 %v107, %v104
  %v150 = vpack.c.b16 %v108, %v105
  %v151 = vpack.c.b16 %v109, %v106
  %v152 = vpack.c.b16 %v113, %v110
  %v153 = vpack.c.b16 %v114, %v111
  %v154 = vpack.c.b16 %v115, %v112
  %v155 = vpack.c.b16 %v119, %v116
  %v156 = vpack.c.b16 %v120, %v117
  %v157 = vpack.c.b16 %v121, %v118
  %v158 = vpack.c.b16 %v125, %v122
  %v159 = vpack.c.b16 %v126, %v123
  %v160 = vpack.c.b16 %v127, %v124
  %v161 = vpack.c.b16 %v131, %v128
  %v162 = vpack.c.b16 %v132, %v129
  %v163 = vpack.c.b16 %v133, %v130
  %v164 = vpack.c.b16 %v137, %v134
  %v165 = vpack.c.b16 %v138, %v135
  %v166 = vpack.c.b16 %v139, %v136
  %v167 = vpack.c.b16 %v143, %v140
  %v168 = vpack.c.b16 %v144, %v141
  %v169 = vpack.c.b16 %v145, %v142
  %194 = vmatprep.subr.bf16.mxu0 %v147
  %195 = vmatpush1.bf16.msra.mxu0 %v146
  %196 = vmatprep.subr.bf16.mxu0 %v150
  %197 = vmatpush1.bf16.msra.mxu0 %v149
  %198 = vmatprep.subr.bf16.mxu0 %v153
  %199 = vmatpush1.bf16.msra.mxu0 %v152
  %200 = vmatprep.subr.bf16.mxu0 %v156
  %201 = vmatpush1.bf16.msra.mxu0 %v155
  %202 = vmatprep.subr.bf16.mxu0 %v159
  %203 = vmatpush1.bf16.msra.mxu0 %v158
  %204 = vmatprep.subr.bf16.mxu0 %v162
  %205 = vmatpush1.bf16.msra.mxu0 %v161
  %206 = vmatprep.subr.bf16.mxu0 %v165
  %207 = vmatpush1.bf16.msra.mxu0 %v164
  %208 = vmatprep.subr.bf16.mxu0 %v168
  %209 = vmatpush1.bf16.msra.mxu0 %v167
  %210 = vmatprep.subr.bf16.mxu0 0
  %211 = vmatpush1.bf16.msra.mxu0 0
  %212 = vmatprep.subr.bf16.mxu0 0
  %213 = vmatpush1.bf16.msra.mxu0 0
  %214 = vmatprep.subr.bf16.mxu0 0
  %215 = vmatpush1.bf16.msra.mxu0 0
  %216 = vmatprep.subr.bf16.mxu0 0
  %217 = vmatpush1.bf16.msra.mxu0 0
  %218 = vmatprep.subr.bf16.mxu0 0
  %219 = vmatpush1.bf16.msra.mxu0 0
  %220 = vmatprep.subr.bf16.mxu0 0
  %221 = vmatpush1.bf16.msra.mxu0 0
  %222 = vmatprep.subr.bf16.mxu0 0
  %223 = vmatpush1.bf16.msra.mxu0 0
  %224 = vmatprep.subr.bf16.mxu0 0
  %225 = vmatpush1.bf16.msra.mxu0 0
  %226 = vmatprep.mubr.bf16.mxu0 0
  %227 = vmatmul.mubr.bf16.gmra.mrb[0].mxu0 %v65
  %v228 = vpop.f32.mrb[0].mxu0
  %v229 = vadd.f32 0.0, %v228
  %v230 = vpop.f32.mrb[0].mxu0
  %v231 = vadd.f32 0.0, %v230
  %v232 = vpop.f32.mrb[0].mxu0
  %v233 = vpop.f32.mrb[0].mxu0
  %234 = vdwg.mxu0
  %235 = vmatprep.subr.bf16.mxu0 0
  %236 = vmatpush1.bf16.msra.mxu0 %v148
  %237 = vmatprep.subr.bf16.mxu0 0
  %238 = vmatpush1.bf16.msra.mxu0 %v151
  %239 = vmatprep.subr.bf16.mxu0 0
  %240 = vmatpush1.bf16.msra.mxu0 %v154
  %241 = vmatprep.subr.bf16.mxu0 0
  %242 = vmatpush1.bf16.msra.mxu0 %v157
  %243 = vmatprep.subr.bf16.mxu0 0
  %244 = vmatpush1.bf16.msra.mxu0 %v160
  %245 = vmatprep.subr.bf16.mxu0 0
  %246 = vmatpush1.bf16.msra.mxu0 %v163
  %247 = vmatprep.subr.bf16.mxu0 0
  %248 = vmatpush1.bf16.msra.mxu0 %v166
  %249 = vmatprep.subr.bf16.mxu0 0
  %250 = vmatpush1.bf16.msra.mxu0 %v169
  %251 = vmatprep.subr.bf16.mxu0 0
  %252 = vmatpush1.bf16.msra.mxu0 0
  %253 = vmatprep.subr.bf16.mxu0 0
  %254 = vmatpush1.bf16.msra.mxu0 0
  %255 = vmatprep.subr.bf16.mxu0 0
  %256 = vmatpush1.bf16.msra.mxu0 0
  %257 = vmatprep.subr.bf16.mxu0 0
  %258 = vmatpush1.bf16.msra.mxu0 0
  %259 = vmatprep.subr.bf16.mxu0 0
  %260 = vmatpush1.bf16.msra.mxu0 0
  %261 = vmatprep.subr.bf16.mxu0 0
  %262 = vmatpush1.bf16.msra.mxu0 0
  %263 = vmatprep.subr.bf16.mxu0 0
  %264 = vmatpush1.bf16.msra.mxu0 0
  %265 = vmatprep.subr.bf16.mxu0 0
  %266 = vmatpush1.bf16.msra.mxu0 0
  %267 = vmatprep.mubr.bf16.mxu0 0
  %268 = vmatmul.mubr.bf16.gmra.mrb[0].mxu0 %v65
  %v269 = vpop.f32.mrb[0].mxu0
  %v270 = vadd.f32 0.0, %v269
  %v271 = vpop.f32.mrb[0].mxu0
  %v272 = vpop.f32.mrb[0].mxu0
  %v273 = vpop.f32.mrb[0].mxu0
  %274 = vdwg.mxu0
  %v275 = vadd.f32 %v62, %v229
  %v276 = vxor.u32 %v275, 2147483648
  %v277 = vmul.f32 %v276, 1.442695
  %v278 = vpow.pop %v277
  %v279 = vadd.f32 %v278, 1.0
  %v280 = vrcp.pop %v279
  %v281 = vmul.f32 1.0, %v280
  %v282 = vadd.f32 %v63, %v231
  %v283 = vxor.u32 %v282, 2147483648
  %v284 = vmul.f32 %v283, 1.442695
  %v285 = vpow.pop %v284
  %v286 = vadd.f32 %v285, 1.0
  %v287 = vrcp.pop %v286
  %v288 = vmul.f32 1.0, %v287
  %v289 = vadd.f32 %v270, %v57
  %v290 = vmul.f32 %v281, %v289
  %v291 = vadd.f32 %v64, %v290
  %v292 = vtanh.pop %v291
  %v293 = vsub.f32 1.0, %v288
  %v294 = vmul.f32 %v293, %v292
  %v295 = vmul.f32 %v288, %v59
  %v296 = vadd.f32 %v294, %v295
  %297 = vst [vmem:[%s3] sm:$0xff] %v296
  %s298 = scalar_lea.vmem %s0, 12
  %v299 = vld [vmem:[%s298] sm:$0xff]
  %v300 = vld [vmem:[%s298 + $0x8] sm:$0xf]
  %v301 = vunpack.c.l.bf16 %v299
  %v302 = vunpack.c.h.bf16 %v299
  %v303 = vunpack.c.l.bf16 %v300
  %v304 = vpack.c.bf16 %v296, %v296
  %305 = vmatprep.subr.bf16.mxu0 %v147
  %306 = vmatpush1.bf16.msra.mxu0 %v146
  %307 = vmatprep.subr.bf16.mxu0 %v150
  %308 = vmatpush1.bf16.msra.mxu0 %v149
  %309 = vmatprep.subr.bf16.mxu0 %v153
  %310 = vmatpush1.bf16.msra.mxu0 %v152
  %311 = vmatprep.subr.bf16.mxu0 %v156
  %312 = vmatpush1.bf16.msra.mxu0 %v155
  %313 = vmatprep.subr.bf16.mxu0 %v159
  %314 = vmatpush1.bf16.msra.mxu0 %v158
  %315 = vmatprep.subr.bf16.mxu0 %v162
  %316 = vmatpush1.bf16.msra.mxu0 %v161
  %317 = vmatprep.subr.bf16.mxu0 %v165
  %318 = vmatpush1.bf16.msra.mxu0 %v164
  %319 = vmatprep.subr.bf16.mxu0 %v168
  %320 = vmatpush1.bf16.msra.mxu0 %v167
  %321 = vmatprep.subr.bf16.mxu0 0
  %322 = vmatpush1.bf16.msra.mxu0 0
  %323 = vmatprep.subr.bf16.mxu0 0
  %324 = vmatpush1.bf16.msra.mxu0 0
  %325 = vmatprep.subr.bf16.mxu0 0
  %326 = vmatpush1.bf16.msra.mxu0 0
  %327 = vmatprep.subr.bf16.mxu0 0
  %328 = vmatpush1.bf16.msra.mxu0 0
  %329 = vmatprep.subr.bf16.mxu0 0
  %330 = vmatpush1.bf16.msra.mxu0 0
  %331 = vmatprep.subr.bf16.mxu0 0
  %332 = vmatpush1.bf16.msra.mxu0 0
  %333 = vmatprep.subr.bf16.mxu0 0
  %334 = vmatpush1.bf16.msra.mxu0 0
  %335 = vmatprep.subr.bf16.mxu0 0
  %336 = vmatpush1.bf16.msra.mxu0 0
  %337 = vmatprep.mubr.bf16.mxu0 0
  %338 = vmatmul.mubr.bf16.gmra.mrb[0].mxu0 %v304
  %v339 = vpop.f32.mrb[0].mxu0
  %v340 = vadd.f32 0.0, %v339
  %v341 = vpop.f32.mrb[0].mxu0
  %v342 = vadd.f32 0.0, %v341
  %v343 = vpop.f32.mrb[0].mxu0
  %v344 = vpop.f32.mrb[0].mxu0
  %345 = vdwg.mxu0
  %346 = vmatprep.subr.bf16.mxu0 0
  %347 = vmatpush1.bf16.msra.mxu0 %v148
  %348 = vmatprep.subr.bf16.mxu0 0
  %349 = vmatpush1.bf16.msra.mxu0 %v151
  %350 = vmatprep.subr.bf16.mxu0 0
  %351 = vmatpush1.bf16.msra.mxu0 %v154
  %352 = vmatprep.subr.bf16.mxu0 0
  %353 = vmatpush1.bf16.msra.mxu0 %v157
  %354 = vmatprep.subr.bf16.mxu0 0
  %355 = vmatpush1.bf16.msra.mxu0 %v160
  %356 = vmatprep.subr.bf16.mxu0 0
  %357 = vmatpush1.bf16.msra.mxu0 %v163
  %358 = vmatprep.subr.bf16.mxu0 0
  %359 = vmatpush1.bf16.msra.mxu0 %v166
  %360 = vmatprep.subr.bf16.mxu0 0
  %361 = vmatpush1.bf16.msra.mxu0 %v169
  %362 = vmatprep.subr.bf16.mxu0 0
  %363 = vmatpush1.bf16.msra.mxu0 0
  %364 = vmatprep.subr.bf16.mxu0 0
  %365 = vmatpush1.bf16.msra.mxu0 0
  %366 = vmatprep.subr.bf16.mxu0 0
  %367 = vmatpush1.bf16.msra.mxu0 0
  %368 = vmatprep.subr.bf16.mxu0 0
  %369 = vmatpush1.bf16.msra.mxu0 0
  %370 = vmatprep.subr.bf16.mxu0 0
  %371 = vmatpush1.bf16.msra.mxu0 0
  %372 = vmatprep.subr.bf16.mxu0 0
  %373 = vmatpush1.bf16.msra.mxu0 0
  %374 = vmatprep.subr.bf16.mxu0 0
  %375 = vmatpush1.bf16.msra.mxu0 0
  %376 = vmatprep.subr.bf16.mxu0 0
  %377 = vmatpush1.bf16.msra.mxu0 0
  %378 = vmatprep.mubr.bf16.mxu0 0
  %379 = vmatmul.mubr.bf16.gmra.mrb[0].mxu0 %v304
  %v380 = vpop.f32.mrb[0].mxu0
  %v381 = vadd.f32 0.0, %v380
  %v382 = vpop.f32.mrb[0].mxu0
  %v383 = vpop.f32.mrb[0].mxu0
  %v384 = vpop.f32.mrb[0].mxu0
  %385 = vdwg.mxu0
  %v386 = vadd.f32 %v301, %v340
  %v387 = vxor.u32 %v386, 2147483648
  %v388 = vmul.f32 %v387, 1.442695
  %v389 = vpow.pop %v388
  %v390 = vadd.f32 %v389, 1.0
  %v391 = vrcp.pop %v390
  %v392 = vmul.f32 1.0, %v391
  %v393 = vadd.f32 %v302, %v342
  %v394 = vxor.u32 %v393, 2147483648
  %v395 = vmul.f32 %v394, 1.442695
  %v396 = vpow.pop %v395
  %v397 = vadd.f32 %v396, 1.0
  %v398 = vrcp.pop %v397
  %v399 = vmul.f32 1.0, %v398
  %v400 = vadd.f32 %v381, %v57
  %v401 = vmul.f32 %v392, %v400
  %v402 = vadd.f32 %v303, %v401
  %v403 = vtanh.pop %v402
  %v404 = vsub.f32 1.0, %v399
  %v405 = vmul.f32 %v404, %v403
  %v406 = vmul.f32 %v399, %v296
  %v407 = vadd.f32 %v405, %v406
  %s408 = scalar_lea.vmem %s3, 8
  %409 = vst [vmem:[%s408] sm:$0xff] %v407
  %s410 = scalar_lea.vmem %s0, 24
  %v411 = vld [vmem:[%s410] sm:$0xff]
  %v412 = vld [vmem:[%s410 + $0x8] sm:$0xf]
  %v413 = vunpack.c.l.bf16 %v411
  %v414 = vunpack.c.h.bf16 %v411
  %v415 = vunpack.c.l.bf16 %v412
  %v416 = vpack.c.bf16 %v407, %v407
  %417 = vmatprep.subr.bf16.mxu0 %v147
  %418 = vmatpush1.bf16.msra.mxu0 %v146
  %419 = vmatprep.subr.bf16.mxu0 %v150
  %420 = vmatpush1.bf16.msra.mxu0 %v149
  %421 = vmatprep.subr.bf16.mxu0 %v153
  %422 = vmatpush1.bf16.msra.mxu0 %v152
  %423 = vmatprep.subr.bf16.mxu0 %v156
  %424 = vmatpush1.bf16.msra.mxu0 %v155
  %425 = vmatprep.subr.bf16.mxu0 %v159
  %426 = vmatpush1.bf16.msra.mxu0 %v158
  %427 = vmatprep.subr.bf16.mxu0 %v162
  %428 = vmatpush1.bf16.msra.mxu0 %v161
  %429 = vmatprep.subr.bf16.mxu0 %v165
  %430 = vmatpush1.bf16.msra.mxu0 %v164
  %431 = vmatprep.subr.bf16.mxu0 %v168
  %432 = vmatpush1.bf16.msra.mxu0 %v167
  %433 = vmatprep.subr.bf16.mxu0 0
  %434 = vmatpush1.bf16.msra.mxu0 0
  %435 = vmatprep.subr.bf16.mxu0 0
  %436 = vmatpush1.bf16.msra.mxu0 0
  %437 = vmatprep.subr.bf16.mxu0 0
  %438 = vmatpush1.bf16.msra.mxu0 0
  %439 = vmatprep.subr.bf16.mxu0 0
  %440 = vmatpush1.bf16.msra.mxu0 0
  %441 = vmatprep.subr.bf16.mxu0 0
  %442 = vmatpush1.bf16.msra.mxu0 0
  %443 = vmatprep.subr.bf16.mxu0 0
  %444 = vmatpush1.bf16.msra.mxu0 0
  %445 = vmatprep.subr.bf16.mxu0 0
  %446 = vmatpush1.bf16.msra.mxu0 0
  %447 = vmatprep.subr.bf16.mxu0 0
  %448 = vmatpush1.bf16.msra.mxu0 0
  %449 = vmatprep.mubr.bf16.mxu0 0
  %450 = vmatmul.mubr.bf16.gmra.mrb[0].mxu0 %v416
  %v451 = vpop.f32.mrb[0].mxu0
  %v452 = vadd.f32 0.0, %v451
  %v453 = vpop.f32.mrb[0].mxu0
  %v454 = vadd.f32 0.0, %v453
  %v455 = vpop.f32.mrb[0].mxu0
  %v456 = vpop.f32.mrb[0].mxu0
  %457 = vdwg.mxu0
  %458 = vmatprep.subr.bf16.mxu0 0
  %459 = vmatpush1.bf16.msra.mxu0 %v148
  %460 = vmatprep.subr.bf16.mxu0 0
  %461 = vmatpush1.bf16.msra.mxu0 %v151
  %462 = vmatprep.subr.bf16.mxu0 0
  %463 = vmatpush1.bf16.msra.mxu0 %v154
  %464 = vmatprep.subr.bf16.mxu0 0
  %465 = vmatpush1.bf16.msra.mxu0 %v157
  %466 = vmatprep.subr.bf16.mxu0 0
  %467 = vmatpush1.bf16.msra.mxu0 %v160
  %468 = vmatprep.subr.bf16.mxu0 0
  %469 = vmatpush1.bf16.msra.mxu0 %v163
  %470 = vmatprep.subr.bf16.mxu0 0
  %471 = vmatpush1.bf16.msra.mxu0 %v166
  %472 = vmatprep.subr.bf16.mxu0 0
  %473 = vmatpush1.bf16.msra.mxu0 %v169
  %474 = vmatprep.subr.bf16.mxu0 0
  %475 = vmatpush1.bf16.msra.mxu0 0
  %476 = vmatprep.subr.bf16.mxu0 0
  %477 = vmatpush1.bf16.msra.mxu0 0
  %478 = vmatprep.subr.bf16.mxu0 0
  %479 = vmatpush1.bf16.msra.mxu0 0
  %480 = vmatprep.subr.bf16.mxu0 0
  %481 = vmatpush1.bf16.msra.mxu0 0
  %482 = vmatprep.subr.bf16.mxu0 0
  %483 = vmatpush1.bf16.msra.mxu0 0
  %484 = vmatprep.subr.bf16.mxu0 0
  %485 = vmatpush1.bf16.msra.mxu0 0
  %486 = vmatprep.subr.bf16.mxu0 0
  %487 = vmatpush1.bf16.msra.mxu0 0
  %488 = vmatprep.subr.bf16.mxu0 0
  %489 = vmatpush1.bf16.msra.mxu0 0
  %490 = vmatprep.mubr.bf16.mxu0 0
  %491 = vmatmul.mubr.bf16.gmra.mrb[0].mxu0 %v416
  %v492 = vpop.f32.mrb[0].mxu0
  %v493 = vadd.f32 0.0, %v492
  %v494 = vpop.f32.mrb[0].mxu0
  %v495 = vpop.f32.mrb[0].mxu0
  %v496 = vpop.f32.mrb[0].mxu0
  %497 = vdwg.mxu0
  %v498 = vadd.f32 %v413, %v452
  %v499 = vxor.u32 %v498, 2147483648
  %v500 = vmul.f32 %v499, 1.442695
  %v501 = vpow.pop %v500
  %v502 = vadd.f32 %v501, 1.0
  %v503 = vrcp.pop %v502
  %v504 = vmul.f32 1.0, %v503
  %v505 = vadd.f32 %v414, %v454
  %v506 = vxor.u32 %v505, 2147483648
  %v507 = vmul.f32 %v506, 1.442695
  %v508 = vpow.pop %v507
  %v509 = vadd.f32 %v508, 1.0
  %v510 = vrcp.pop %v509
  %v511 = vmul.f32 1.0, %v510
  %v512 = vadd.f32 %v493, %v57
  %v513 = vmul.f32 %v504, %v512
  %v514 = vadd.f32 %v415, %v513
  %v515 = vtanh.pop %v514
  %v516 = vsub.f32 1.0, %v511
  %v517 = vmul.f32 %v516, %v515
  %v518 = vmul.f32 %v511, %v407
  %v519 = vadd.f32 %v517, %v518
  %s520 = scalar_lea.vmem %s3, 16
  %521 = vst [vmem:[%s520] sm:$0xff] %v519
  %s522 = scalar_lea.vmem %s0, 36
  %v523 = vld [vmem:[%s522] sm:$0xff]
  %v524 = vld [vmem:[%s522 + $0x8] sm:$0xf]
  %v525 = vunpack.c.l.bf16 %v523
  %v526 = vunpack.c.h.bf16 %v523
  %v527 = vunpack.c.l.bf16 %v524
  %v528 = vpack.c.bf16 %v519, %v519
  %529 = vmatprep.subr.bf16.mxu0 %v147
  %530 = vmatpush1.bf16.msra.mxu0 %v146
  %531 = vmatprep.subr.bf16.mxu0 %v150
  %532 = vmatpush1.bf16.msra.mxu0 %v149
  %533 = vmatprep.subr.bf16.mxu0 %v153
  %534 = vmatpush1.bf16.msra.mxu0 %v152
  %535 = vmatprep.subr.bf16.mxu0 %v156
  %536 = vmatpush1.bf16.msra.mxu0 %v155
  %537 = vmatprep.subr.bf16.mxu0 %v159
  %538 = vmatpush1.bf16.msra.mxu0 %v158
  %539 = vmatprep.subr.bf16.mxu0 %v162
  %540 = vmatpush1.bf16.msra.mxu0 %v161
  %541 = vmatprep.subr.bf16.mxu0 %v165
  %542 = vmatpush1.bf16.msra.mxu0 %v164
  %543 = vmatprep.subr.bf16.mxu0 %v168
  %544 = vmatpush1.bf16.msra.mxu0 %v167
  %545 = vmatprep.subr.bf16.mxu0 0
  %546 = vmatpush1.bf16.msra.mxu0 0
  %547 = vmatprep.subr.bf16.mxu0 0
  %548 = vmatpush1.bf16.msra.mxu0 0
  %549 = vmatprep.subr.bf16.mxu0 0
  %550 = vmatpush1.bf16.msra.mxu0 0
  %551 = vmatprep.subr.bf16.mxu0 0
  %552 = vmatpush1.bf16.msra.mxu0 0
  %553 = vmatprep.subr.bf16.mxu0 0
  %554 = vmatpush1.bf16.msra.mxu0 0
  %555 = vmatprep.subr.bf16.mxu0 0
  %556 = vmatpush1.bf16.msra.mxu0 0
  %557 = vmatprep.subr.bf16.mxu0 0
  %558 = vmatpush1.bf16.msra.mxu0 0
  %559 = vmatprep.subr.bf16.mxu0 0
  %560 = vmatpush1.bf16.msra.mxu0 0
  %561 = vmatprep.mubr.bf16.mxu0 0
  %562 = vmatmul.mubr.bf16.gmra.mrb[0].mxu0 %v528
  %v563 = vpop.f32.mrb[0].mxu0
  %v564 = vadd.f32 0.0, %v563
  %v565 = vpop.f32.mrb[0].mxu0
  %v566 = vadd.f32 0.0, %v565
  %v567 = vpop.f32.mrb[0].mxu0
  %v568 = vpop.f32.mrb[0].mxu0
  %569 = vdwg.mxu0
  %570 = vmatprep.subr.bf16.mxu0 0
  %571 = vmatpush1.bf16.msra.mxu0 %v148
  %572 = vmatprep.subr.bf16.mxu0 0
  %573 = vmatpush1.bf16.msra.mxu0 %v151
  %574 = vmatprep.subr.bf16.mxu0 0
  %575 = vmatpush1.bf16.msra.mxu0 %v154
  %576 = vmatprep.subr.bf16.mxu0 0
  %577 = vmatpush1.bf16.msra.mxu0 %v157
  %578 = vmatprep.subr.bf16.mxu0 0
  %579 = vmatpush1.bf16.msra.mxu0 %v160
  %580 = vmatprep.subr.bf16.mxu0 0
  %581 = vmatpush1.bf16.msra.mxu0 %v163
  %582 = vmatprep.subr.bf16.mxu0 0
  %583 = vmatpush1.bf16.msra.mxu0 %v166
  %584 = vmatprep.subr.bf16.mxu0 0
  %585 = vmatpush1.bf16.msra.mxu0 %v169
  %586 = vmatprep.subr.bf16.mxu0 0
  %587 = vmatpush1.bf16.msra.mxu0 0
  %588 = vmatprep.subr.bf16.mxu0 0
  %589 = vmatpush1.bf16.msra.mxu0 0
  %590 = vmatprep.subr.bf16.mxu0 0
  %591 = vmatpush1.bf16.msra.mxu0 0
  %592 = vmatprep.subr.bf16.mxu0 0
  %593 = vmatpush1.bf16.msra.mxu0 0
  %594 = vmatprep.subr.bf16.mxu0 0
  %595 = vmatpush1.bf16.msra.mxu0 0
  %596 = vmatprep.subr.bf16.mxu0 0
  %597 = vmatpush1.bf16.msra.mxu0 0
  %598 = vmatprep.subr.bf16.mxu0 0
  %599 = vmatpush1.bf16.msra.mxu0 0
  %600 = vmatprep.subr.bf16.mxu0 0
  %601 = vmatpush1.bf16.msra.mxu0 0
  %602 = vmatprep.mubr.bf16.mxu0 0
  %603 = vmatmul.mubr.bf16.gmra.mrb[0].mxu0 %v528
  %v604 = vpop.f32.mrb[0].mxu0
  %v605 = vadd.f32 0.0, %v604
  %v606 = vpop.f32.mrb[0].mxu0
  %v607 = vpop.f32.mrb[0].mxu0
  %v608 = vpop.f32.mrb[0].mxu0
  %609 = vdwg.mxu0
  %v610 = vadd.f32 %v525, %v564
  %v611 = vxor.u32 %v610, 2147483648
  %v612 = vmul.f32 %v611, 1.442695
  %v613 = vpow.pop %v612
  %v614 = vadd.f32 %v613, 1.0
  %v615 = vrcp.pop %v614
  %v616 = vmul.f32 1.0, %v615
  %v617 = vadd.f32 %v526, %v566
  %v618 = vxor.u32 %v617, 2147483648
  %v619 = vmul.f32 %v618, 1.442695
  %v620 = vpow.pop %v619
  %v621 = vadd.f32 %v620, 1.0
  %v622 = vrcp.pop %v621
  %v623 = vmul.f32 1.0, %v622
  %v624 = vadd.f32 %v605, %v57
  %v625 = vmul.f32 %v616, %v624
  %v626 = vadd.f32 %v527, %v625
  %v627 = vtanh.pop %v626
  %v628 = vsub.f32 1.0, %v623
  %v629 = vmul.f32 %v628, %v627
  %v630 = vmul.f32 %v623, %v519
  %v631 = vadd.f32 %v629, %v630
  %s632 = scalar_lea.vmem %s3, 24
  %633 = vst [vmem:[%s632] sm:$0xff] %v631
  %s634 = scalar_lea.vmem %s0, 48
  %v635 = vld [vmem:[%s634] sm:$0xff]
  %v636 = vld [vmem:[%s634 + $0x8] sm:$0xf]
  %v637 = vunpack.c.l.bf16 %v635
  %v638 = vunpack.c.h.bf16 %v635
  %v639 = vunpack.c.l.bf16 %v636
  %v640 = vpack.c.bf16 %v631, %v631
  %641 = vmatprep.subr.bf16.mxu0 %v147
  %642 = vmatpush1.bf16.msra.mxu0 %v146
  %643 = vmatprep.subr.bf16.mxu0 %v150
  %644 = vmatpush1.bf16.msra.mxu0 %v149
  %645 = vmatprep.subr.bf16.mxu0 %v153
  %646 = vmatpush1.bf16.msra.mxu0 %v152
  %647 = vmatprep.subr.bf16.mxu0 %v156
  %648 = vmatpush1.bf16.msra.mxu0 %v155
  %649 = vmatprep.subr.bf16.mxu0 %v159
  %650 = vmatpush1.bf16.msra.mxu0 %v158
  %651 = vmatprep.subr.bf16.mxu0 %v162
  %652 = vmatpush1.bf16.msra.mxu0 %v161
  %653 = vmatprep.subr.bf16.mxu0 %v165
  %654 = vmatpush1.bf16.msra.mxu0 %v164
  %655 = vmatprep.subr.bf16.mxu0 %v168
  %656 = vmatpush1.bf16.msra.mxu0 %v167
  %657 = vmatprep.subr.bf16.mxu0 0
  %658 = vmatpush1.bf16.msra.mxu0 0
  %659 = vmatprep.subr.bf16.mxu0 0
  %660 = vmatpush1.bf16.msra.mxu0 0
  %661 = vmatprep.subr.bf16.mxu0 0
  %662 = vmatpush1.bf16.msra.mxu0 0
  %663 = vmatprep.subr.bf16.mxu0 0
  %664 = vmatpush1.bf16.msra.mxu0 0
  %665 = vmatprep.subr.bf16.mxu0 0
  %666 = vmatpush1.bf16.msra.mxu0 0
  %667 = vmatprep.subr.bf16.mxu0 0
  %668 = vmatpush1.bf16.msra.mxu0 0
  %669 = vmatprep.subr.bf16.mxu0 0
  %670 = vmatpush1.bf16.msra.mxu0 0
  %671 = vmatprep.subr.bf16.mxu0 0
  %672 = vmatpush1.bf16.msra.mxu0 0
  %673 = vmatprep.mubr.bf16.mxu0 0
  %674 = vmatmul.mubr.bf16.gmra.mrb[0].mxu0 %v640
  %v675 = vpop.f32.mrb[0].mxu0
  %v676 = vadd.f32 0.0, %v675
  %v677 = vpop.f32.mrb[0].mxu0
  %v678 = vadd.f32 0.0, %v677
  %v679 = vpop.f32.mrb[0].mxu0
  %v680 = vpop.f32.mrb[0].mxu0
  %681 = vdwg.mxu0
  %682 = vmatprep.subr.bf16.mxu0 0
  %683 = vmatpush1.bf16.msra.mxu0 %v148
  %684 = vmatprep.subr.bf16.mxu0 0
  %685 = vmatpush1.bf16.msra.mxu0 %v151
  %686 = vmatprep.subr.bf16.mxu0 0
  %687 = vmatpush1.bf16.msra.mxu0 %v154
  %688 = vmatprep.subr.bf16.mxu0 0
  %689 = vmatpush1.bf16.msra.mxu0 %v157
  %690 = vmatprep.subr.bf16.mxu0 0
  %691 = vmatpush1.bf16.msra.mxu0 %v160
  %692 = vmatprep.subr.bf16.mxu0 0
  %693 = vmatpush1.bf16.msra.mxu0 %v163
  %694 = vmatprep.subr.bf16.mxu0 0
  %695 = vmatpush1.bf16.msra.mxu0 %v166
  %696 = vmatprep.subr.bf16.mxu0 0
  %697 = vmatpush1.bf16.msra.mxu0 %v169
  %698 = vmatprep.subr.bf16.mxu0 0
  %699 = vmatpush1.bf16.msra.mxu0 0
  %700 = vmatprep.subr.bf16.mxu0 0
  %701 = vmatpush1.bf16.msra.mxu0 0
  %702 = vmatprep.subr.bf16.mxu0 0
  %703 = vmatpush1.bf16.msra.mxu0 0
  %704 = vmatprep.subr.bf16.mxu0 0
  %705 = vmatpush1.bf16.msra.mxu0 0
  %706 = vmatprep.subr.bf16.mxu0 0
  %707 = vmatpush1.bf16.msra.mxu0 0
  %708 = vmatprep.subr.bf16.mxu0 0
  %709 = vmatpush1.bf16.msra.mxu0 0
  %710 = vmatprep.subr.bf16.mxu0 0
  %711 = vmatpush1.bf16.msra.mxu0 0
  %712 = vmatprep.subr.bf16.mxu0 0
  %713 = vmatpush1.bf16.msra.mxu0 0
  %714 = vmatprep.mubr.bf16.mxu0 0
  %715 = vmatmul.mubr.bf16.gmra.mrb[0].mxu0 %v640
  %v716 = vpop.f32.mrb[0].mxu0
  %v717 = vadd.f32 0.0, %v716
  %v718 = vpop.f32.mrb[0].mxu0
  %v719 = vpop.f32.mrb[0].mxu0
  %v720 = vpop.f32.mrb[0].mxu0
  %721 = vdwg.mxu0
  %v722 = vadd.f32 %v637, %v676
  %v723 = vxor.u32 %v722, 2147483648
  %v724 = vmul.f32 %v723, 1.442695
  %v725 = vpow.pop %v724
  %v726 = vadd.f32 %v725, 1.0
  %v727 = vrcp.pop %v726
  %v728 = vmul.f32 1.0, %v727
  %v729 = vadd.f32 %v638, %v678
  %v730 = vxor.u32 %v729, 2147483648
  %v731 = vmul.f32 %v730, 1.442695
  %v732 = vpow.pop %v731
  %v733 = vadd.f32 %v732, 1.0
  %v734 = vrcp.pop %v733
  %v735 = vmul.f32 1.0, %v734
  %v736 = vadd.f32 %v717, %v57
  %v737 = vmul.f32 %v728, %v736
  %v738 = vadd.f32 %v639, %v737
  %v739 = vtanh.pop %v738
  %v740 = vsub.f32 1.0, %v735
  %v741 = vmul.f32 %v740, %v739
  %v742 = vmul.f32 %v735, %v631
  %v743 = vadd.f32 %v741, %v742
  %s744 = scalar_lea.vmem %s3, 32
  %745 = vst [vmem:[%s744] sm:$0xff] %v743
  %s746 = scalar_lea.vmem %s0, 60
  %v747 = vld [vmem:[%s746] sm:$0xff]
  %v748 = vld [vmem:[%s746 + $0x8] sm:$0xf]
  %v749 = vunpack.c.l.bf16 %v747
  %v750 = vunpack.c.h.bf16 %v747
  %v751 = vunpack.c.l.bf16 %v748
  %v752 = vpack.c.bf16 %v743, %v743
  %753 = vmatprep.subr.bf16.mxu0 %v147
  %754 = vmatpush1.bf16.msra.mxu0 %v146
  %755 = vmatprep.subr.bf16.mxu0 %v150
  %756 = vmatpush1.bf16.msra.mxu0 %v149
  %757 = vmatprep.subr.bf16.mxu0 %v153
  %758 = vmatpush1.bf16.msra.mxu0 %v152
  %759 = vmatprep.subr.bf16.mxu0 %v156
  %760 = vmatpush1.bf16.msra.mxu0 %v155
  %761 = vmatprep.subr.bf16.mxu0 %v159
  %762 = vmatpush1.bf16.msra.mxu0 %v158
  %763 = vmatprep.subr.bf16.mxu0 %v162
  %764 = vmatpush1.bf16.msra.mxu0 %v161
  %765 = vmatprep.subr.bf16.mxu0 %v165
  %766 = vmatpush1.bf16.msra.mxu0 %v164
  %767 = vmatprep.subr.bf16.mxu0 %v168
  %768 = vmatpush1.bf16.msra.mxu0 %v167
  %769 = vmatprep.subr.bf16.mxu0 0
  %770 = vmatpush1.bf16.msra.mxu0 0
  %771 = vmatprep.subr.bf16.mxu0 0
  %772 = vmatpush1.bf16.msra.mxu0 0
  %773 = vmatprep.subr.bf16.mxu0 0
  %774 = vmatpush1.bf16.msra.mxu0 0
  %775 = vmatprep.subr.bf16.mxu0 0
  %776 = vmatpush1.bf16.msra.mxu0 0
  %777 = vmatprep.subr.bf16.mxu0 0
  %778 = vmatpush1.bf16.msra.mxu0 0
  %779 = vmatprep.subr.bf16.mxu0 0
  %780 = vmatpush1.bf16.msra.mxu0 0
  %781 = vmatprep.subr.bf16.mxu0 0
  %782 = vmatpush1.bf16.msra.mxu0 0
  %783 = vmatprep.subr.bf16.mxu0 0
  %784 = vmatpush1.bf16.msra.mxu0 0
  %785 = vmatprep.mubr.bf16.mxu0 0
  %786 = vmatmul.mubr.bf16.gmra.mrb[0].mxu0 %v752
  %v787 = vpop.f32.mrb[0].mxu0
  %v788 = vadd.f32 0.0, %v787
  %v789 = vpop.f32.mrb[0].mxu0
  %v790 = vadd.f32 0.0, %v789
  %v791 = vpop.f32.mrb[0].mxu0
  %v792 = vpop.f32.mrb[0].mxu0
  %793 = vdwg.mxu0
  %794 = vmatprep.subr.bf16.mxu0 0
  %795 = vmatpush1.bf16.msra.mxu0 %v148
  %796 = vmatprep.subr.bf16.mxu0 0
  %797 = vmatpush1.bf16.msra.mxu0 %v151
  %798 = vmatprep.subr.bf16.mxu0 0
  %799 = vmatpush1.bf16.msra.mxu0 %v154
  %800 = vmatprep.subr.bf16.mxu0 0
  %801 = vmatpush1.bf16.msra.mxu0 %v157
  %802 = vmatprep.subr.bf16.mxu0 0
  %803 = vmatpush1.bf16.msra.mxu0 %v160
  %804 = vmatprep.subr.bf16.mxu0 0
  %805 = vmatpush1.bf16.msra.mxu0 %v163
  %806 = vmatprep.subr.bf16.mxu0 0
  %807 = vmatpush1.bf16.msra.mxu0 %v166
  %808 = vmatprep.subr.bf16.mxu0 0
  %809 = vmatpush1.bf16.msra.mxu0 %v169
  %810 = vmatprep.subr.bf16.mxu0 0
  %811 = vmatpush1.bf16.msra.mxu0 0
  %812 = vmatprep.subr.bf16.mxu0 0
  %813 = vmatpush1.bf16.msra.mxu0 0
  %814 = vmatprep.subr.bf16.mxu0 0
  %815 = vmatpush1.bf16.msra.mxu0 0
  %816 = vmatprep.subr.bf16.mxu0 0
  %817 = vmatpush1.bf16.msra.mxu0 0
  %818 = vmatprep.subr.bf16.mxu0 0
  %819 = vmatpush1.bf16.msra.mxu0 0
  %820 = vmatprep.subr.bf16.mxu0 0
  %821 = vmatpush1.bf16.msra.mxu0 0
  %822 = vmatprep.subr.bf16.mxu0 0
  %823 = vmatpush1.bf16.msra.mxu0 0
  %824 = vmatprep.subr.bf16.mxu0 0
  %825 = vmatpush1.bf16.msra.mxu0 0
  %826 = vmatprep.mubr.bf16.mxu0 0
  %827 = vmatmul.mubr.bf16.gmra.mrb[0].mxu0 %v752
  %v828 = vpop.f32.mrb[0].mxu0
  %v829 = vadd.f32 0.0, %v828
  %v830 = vpop.f32.mrb[0].mxu0
  %v831 = vpop.f32.mrb[0].mxu0
  %v832 = vpop.f32.mrb[0].mxu0
  %833 = vdwg.mxu0
  %v834 = vadd.f32 %v749, %v788
  %v835 = vxor.u32 %v834, 2147483648
  %v836 = vmul.f32 %v835, 1.442695
  %v837 = vpow.pop %v836
  %v838 = vadd.f32 %v837, 1.0
  %v839 = vrcp.pop %v838
  %v840 = vmul.f32 1.0, %v839
  %v841 = vadd.f32 %v750, %v790
  %v842 = vxor.u32 %v841, 2147483648
  %v843 = vmul.f32 %v842, 1.442695
  %v844 = vpow.pop %v843
  %v845 = vadd.f32 %v844, 1.0
  %v846 = vrcp.pop %v845
  %v847 = vmul.f32 1.0, %v846
  %v848 = vadd.f32 %v829, %v57
  %v849 = vmul.f32 %v840, %v848
  %v850 = vadd.f32 %v751, %v849
  %v851 = vtanh.pop %v850
  %v852 = vsub.f32 1.0, %v847
  %v853 = vmul.f32 %v852, %v851
  %v854 = vmul.f32 %v847, %v743
  %v855 = vadd.f32 %v853, %v854
  %s856 = scalar_lea.vmem %s3, 40
  %857 = vst [vmem:[%s856] sm:$0xff] %v855
  %s858 = scalar_lea.vmem %s0, 72
  %v859 = vld [vmem:[%s858] sm:$0xff]
  %v860 = vld [vmem:[%s858 + $0x8] sm:$0xf]
  %v861 = vunpack.c.l.bf16 %v859
  %v862 = vunpack.c.h.bf16 %v859
  %v863 = vunpack.c.l.bf16 %v860
  %v864 = vpack.c.bf16 %v855, %v855
  %865 = vmatprep.subr.bf16.mxu0 %v147
  %866 = vmatpush1.bf16.msra.mxu0 %v146
  %867 = vmatprep.subr.bf16.mxu0 %v150
  %868 = vmatpush1.bf16.msra.mxu0 %v149
  %869 = vmatprep.subr.bf16.mxu0 %v153
  %870 = vmatpush1.bf16.msra.mxu0 %v152
  %871 = vmatprep.subr.bf16.mxu0 %v156
  %872 = vmatpush1.bf16.msra.mxu0 %v155
  %873 = vmatprep.subr.bf16.mxu0 %v159
  %874 = vmatpush1.bf16.msra.mxu0 %v158
  %875 = vmatprep.subr.bf16.mxu0 %v162
  %876 = vmatpush1.bf16.msra.mxu0 %v161
  %877 = vmatprep.subr.bf16.mxu0 %v165
  %878 = vmatpush1.bf16.msra.mxu0 %v164
  %879 = vmatprep.subr.bf16.mxu0 %v168
  %880 = vmatpush1.bf16.msra.mxu0 %v167
  %881 = vmatprep.subr.bf16.mxu0 0
  %882 = vmatpush1.bf16.msra.mxu0 0
  %883 = vmatprep.subr.bf16.mxu0 0
  %884 = vmatpush1.bf16.msra.mxu0 0
  %885 = vmatprep.subr.bf16.mxu0 0
  %886 = vmatpush1.bf16.msra.mxu0 0
  %887 = vmatprep.subr.bf16.mxu0 0
  %888 = vmatpush1.bf16.msra.mxu0 0
  %889 = vmatprep.subr.bf16.mxu0 0
  %890 = vmatpush1.bf16.msra.mxu0 0
  %891 = vmatprep.subr.bf16.mxu0 0
  %892 = vmatpush1.bf16.msra.mxu0 0
  %893 = vmatprep.subr.bf16.mxu0 0
  %894 = vmatpush1.bf16.msra.mxu0 0
  %895 = vmatprep.subr.bf16.mxu0 0
  %896 = vmatpush1.bf16.msra.mxu0 0
  %897 = vmatprep.mubr.bf16.mxu0 0
  %898 = vmatmul.mubr.bf16.gmra.mrb[0].mxu0 %v864
  %v899 = vpop.f32.mrb[0].mxu0
  %v900 = vadd.f32 0.0, %v899
  %v901 = vpop.f32.mrb[0].mxu0
  %v902 = vadd.f32 0.0, %v901
  %v903 = vpop.f32.mrb[0].mxu0
  %v904 = vpop.f32.mrb[0].mxu0
  %905 = vdwg.mxu0
  %906 = vmatprep.subr.bf16.mxu0 0
  %907 = vmatpush1.bf16.msra.mxu0 %v148
  %908 = vmatprep.subr.bf16.mxu0 0
  %909 = vmatpush1.bf16.msra.mxu0 %v151
  %910 = vmatprep.subr.bf16.mxu0 0
  %911 = vmatpush1.bf16.msra.mxu0 %v154
  %912 = vmatprep.subr.bf16.mxu0 0
  %913 = vmatpush1.bf16.msra.mxu0 %v157
  %914 = vmatprep.subr.bf16.mxu0 0
  %915 = vmatpush1.bf16.msra.mxu0 %v160
  %916 = vmatprep.subr.bf16.mxu0 0
  %917 = vmatpush1.bf16.msra.mxu0 %v163
  %918 = vmatprep.subr.bf16.mxu0 0
  %919 = vmatpush1.bf16.msra.mxu0 %v166
  %920 = vmatprep.subr.bf16.mxu0 0
  %921 = vmatpush1.bf16.msra.mxu0 %v169
  %922 = vmatprep.subr.bf16.mxu0 0
  %923 = vmatpush1.bf16.msra.mxu0 0
  %924 = vmatprep.subr.bf16.mxu0 0
  %925 = vmatpush1.bf16.msra.mxu0 0
  %926 = vmatprep.subr.bf16.mxu0 0
  %927 = vmatpush1.bf16.msra.mxu0 0
  %928 = vmatprep.subr.bf16.mxu0 0
  %929 = vmatpush1.bf16.msra.mxu0 0
  %930 = vmatprep.subr.bf16.mxu0 0
  %931 = vmatpush1.bf16.msra.mxu0 0
  %932 = vmatprep.subr.bf16.mxu0 0
  %933 = vmatpush1.bf16.msra.mxu0 0
  %934 = vmatprep.subr.bf16.mxu0 0
  %935 = vmatpush1.bf16.msra.mxu0 0
  %936 = vmatprep.subr.bf16.mxu0 0
  %937 = vmatpush1.bf16.msra.mxu0 0
  %938 = vmatprep.mubr.bf16.mxu0 0
  %939 = vmatmul.mubr.bf16.gmra.mrb[0].mxu0 %v864
  %v940 = vpop.f32.mrb[0].mxu0
  %v941 = vadd.f32 0.0, %v940
  %v942 = vpop.f32.mrb[0].mxu0
  %v943 = vpop.f32.mrb[0].mxu0
  %v944 = vpop.f32.mrb[0].mxu0
  %945 = vdwg.mxu0
  %v946 = vadd.f32 %v861, %v900
  %v947 = vxor.u32 %v946, 2147483648
  %v948 = vmul.f32 %v947, 1.442695
  %v949 = vpow.pop %v948
  %v950 = vadd.f32 %v949, 1.0
  %v951 = vrcp.pop %v950
  %v952 = vmul.f32 1.0, %v951
  %v953 = vadd.f32 %v862, %v902
  %v954 = vxor.u32 %v953, 2147483648
  %v955 = vmul.f32 %v954, 1.442695
  %v956 = vpow.pop %v955
  %v957 = vadd.f32 %v956, 1.0
  %v958 = vrcp.pop %v957
  %v959 = vmul.f32 1.0, %v958
  %v960 = vadd.f32 %v941, %v57
  %v961 = vmul.f32 %v952, %v960
  %v962 = vadd.f32 %v863, %v961
  %v963 = vtanh.pop %v962
  %v964 = vsub.f32 1.0, %v959
  %v965 = vmul.f32 %v964, %v963
  %v966 = vmul.f32 %v959, %v855
  %v967 = vadd.f32 %v965, %v966
  %s968 = scalar_lea.vmem %s3, 48
  %969 = vst [vmem:[%s968] sm:$0xff] %v967
  %s970 = scalar_lea.vmem %s0, 84
  %v971 = vld [vmem:[%s970] sm:$0xff]
  %v972 = vld [vmem:[%s970 + $0x8] sm:$0xf]
  %v973 = vunpack.c.l.bf16 %v971
  %v974 = vunpack.c.h.bf16 %v971
  %v975 = vunpack.c.l.bf16 %v972
  %v976 = vpack.c.bf16 %v967, %v967
  %977 = vmatprep.subr.bf16.mxu0 %v147
  %978 = vmatpush1.bf16.msra.mxu0 %v146
  %979 = vmatprep.subr.bf16.mxu0 %v150
  %980 = vmatpush1.bf16.msra.mxu0 %v149
  %981 = vmatprep.subr.bf16.mxu0 %v153
  %982 = vmatpush1.bf16.msra.mxu0 %v152
  %983 = vmatprep.subr.bf16.mxu0 %v156
  %984 = vmatpush1.bf16.msra.mxu0 %v155
  %985 = vmatprep.subr.bf16.mxu0 %v159
  %986 = vmatpush1.bf16.msra.mxu0 %v158
  %987 = vmatprep.subr.bf16.mxu0 %v162
  %988 = vmatpush1.bf16.msra.mxu0 %v161
  %989 = vmatprep.subr.bf16.mxu0 %v165
  %990 = vmatpush1.bf16.msra.mxu0 %v164
  %991 = vmatprep.subr.bf16.mxu0 %v168
  %992 = vmatpush1.bf16.msra.mxu0 %v167
  %993 = vmatprep.subr.bf16.mxu0 0
  %994 = vmatpush1.bf16.msra.mxu0 0
  %995 = vmatprep.subr.bf16.mxu0 0
  %996 = vmatpush1.bf16.msra.mxu0 0
  %997 = vmatprep.subr.bf16.mxu0 0
  %998 = vmatpush1.bf16.msra.mxu0 0
  %999 = vmatprep.subr.bf16.mxu0 0
  %1000 = vmatpush1.bf16.msra.mxu0 0
  %1001 = vmatprep.subr.bf16.mxu0 0
  %1002 = vmatpush1.bf16.msra.mxu0 0
  %1003 = vmatprep.subr.bf16.mxu0 0
  %1004 = vmatpush1.bf16.msra.mxu0 0
  %1005 = vmatprep.subr.bf16.mxu0 0
  %1006 = vmatpush1.bf16.msra.mxu0 0
  %1007 = vmatprep.subr.bf16.mxu0 0
  %1008 = vmatpush1.bf16.msra.mxu0 0
  %1009 = vmatprep.mubr.bf16.mxu0 0
  %1010 = vmatmul.mubr.bf16.gmra.mrb[0].mxu0 %v976
  %v1011 = vpop.f32.mrb[0].mxu0
  %v1012 = vadd.f32 0.0, %v1011
  %v1013 = vpop.f32.mrb[0].mxu0
  %v1014 = vadd.f32 0.0, %v1013
  %v1015 = vpop.f32.mrb[0].mxu0
  %v1016 = vpop.f32.mrb[0].mxu0
  %1017 = vdwg.mxu0
  %1018 = vmatprep.subr.bf16.mxu0 0
  %1019 = vmatpush1.bf16.msra.mxu0 %v148
  %1020 = vmatprep.subr.bf16.mxu0 0
  %1021 = vmatpush1.bf16.msra.mxu0 %v151
  %1022 = vmatprep.subr.bf16.mxu0 0
  %1023 = vmatpush1.bf16.msra.mxu0 %v154
  %1024 = vmatprep.subr.bf16.mxu0 0
  %1025 = vmatpush1.bf16.msra.mxu0 %v157
  %1026 = vmatprep.subr.bf16.mxu0 0
  %1027 = vmatpush1.bf16.msra.mxu0 %v160
  %1028 = vmatprep.subr.bf16.mxu0 0
  %1029 = vmatpush1.bf16.msra.mxu0 %v163
  %1030 = vmatprep.subr.bf16.mxu0 0
  %1031 = vmatpush1.bf16.msra.mxu0 %v166
  %1032 = vmatprep.subr.bf16.mxu0 0
  %1033 = vmatpush1.bf16.msra.mxu0 %v169
  %1034 = vmatprep.subr.bf16.mxu0 0
  %1035 = vmatpush1.bf16.msra.mxu0 0
  %1036 = vmatprep.subr.bf16.mxu0 0
  %1037 = vmatpush1.bf16.msra.mxu0 0
  %1038 = vmatprep.subr.bf16.mxu0 0
  %1039 = vmatpush1.bf16.msra.mxu0 0
  %1040 = vmatprep.subr.bf16.mxu0 0
  %1041 = vmatpush1.bf16.msra.mxu0 0
  %1042 = vmatprep.subr.bf16.mxu0 0
  %1043 = vmatpush1.bf16.msra.mxu0 0
  %1044 = vmatprep.subr.bf16.mxu0 0
  %1045 = vmatpush1.bf16.msra.mxu0 0
  %1046 = vmatprep.subr.bf16.mxu0 0
  %1047 = vmatpush1.bf16.msra.mxu0 0
  %1048 = vmatprep.subr.bf16.mxu0 0
  %1049 = vmatpush1.bf16.msra.mxu0 0
  %1050 = vmatprep.mubr.bf16.mxu0 0
  %1051 = vmatmul.mubr.bf16.gmra.mrb[0].mxu0 %v976
  %v1052 = vpop.f32.mrb[0].mxu0
  %v1053 = vadd.f32 0.0, %v1052
  %v1054 = vpop.f32.mrb[0].mxu0
  %v1055 = vpop.f32.mrb[0].mxu0
  %v1056 = vpop.f32.mrb[0].mxu0
  %1057 = vdwg.mxu0
  %v1058 = vadd.f32 %v973, %v1012
  %v1059 = vxor.u32 %v1058, 2147483648
  %v1060 = vmul.f32 %v1059, 1.442695
  %v1061 = vpow.pop %v1060
  %v1062 = vadd.f32 %v1061, 1.0
  %v1063 = vrcp.pop %v1062
  %v1064 = vmul.f32 1.0, %v1063
  %v1065 = vadd.f32 %v974, %v1014
  %v1066 = vxor.u32 %v1065, 2147483648
  %v1067 = vmul.f32 %v1066, 1.442695
  %v1068 = vpow.pop %v1067
  %v1069 = vadd.f32 %v1068, 1.0
  %v1070 = vrcp.pop %v1069
  %v1071 = vmul.f32 1.0, %v1070
  %v1072 = vadd.f32 %v1053, %v57
  %v1073 = vmul.f32 %v1064, %v1072
  %v1074 = vadd.f32 %v975, %v1073
  %v1075 = vtanh.pop %v1074
  %v1076 = vsub.f32 1.0, %v1071
  %v1077 = vmul.f32 %v1076, %v1075
  %v1078 = vmul.f32 %v1071, %v967
  %v1079 = vadd.f32 %v1077, %v1078
  %s1080 = scalar_lea.vmem %s3, 56
  %1081 = vst [vmem:[%s1080] sm:$0xff] %v1079
  %1082 = vst [vmem:[#allocation2] sm:$0xff] %v1079
  // Predicated region
  $region18: #{gru_encoder_forward.1} parent=0 // pred_check
    _
  $region19: #{gru_encoder_forward.1} parent=0 // pred_check_branch
    %1084 = sbr.rel (0) target = $region21
  $region20: #{gru_encoder_forward.1} parent=0 // pred_region
    _
  $region21: #{gru_encoder_forward.1} parent=0 // pred_fallthru
    _
  // Predicated region
  $region22: #{gru_encoder_forward.1} parent=0 // pred_check
    _
  $region23: #{gru_encoder_forward.1} parent=0 // pred_check_branch
    %1086 = sbr.rel (0) target = $region25
  $region24: #{gru_encoder_forward.1} parent=0 // pred_region
    _
  $region25: #{gru_encoder_forward.1} parent=0 // pred_fallthru
    _

</llo_original>
